<compile_context>
chip_gen: v7x
topology: tpu7x:2x2x1
jax: 0.10.0
libtpu: 0.0.40
codegen_flags: <defaults>
</compile_context>

<pallas_src>
import math
from functools import partial

import jax
import jax.numpy as jnp
from jax import lax
from jax.experimental import pallas as pl
from jax.experimental.pallas import tpu as pltpu


# ----------------------------------------------------------------------------
# Fused kernel (one grid step == one length-L sequence):
#   router MLP + multi-head self-attention + residual + LayerNorm
# ----------------------------------------------------------------------------
def _imrc_kernel(x_ref, rw1_ref, rb1_ref, rw2_ref, rb2_ref,
                 wqkv_ref, bqkv_ref, wo_ref, bo_ref, gamma_ref, beta_ref,
                 o_ref, p_ref, *, num_heads, eps):
    Hd = wqkv_ref.shape[1] // 3
    dh = Hd // num_heads
    scale = 1.0 / math.sqrt(dh)

    x = x_ref[0].astype(jnp.float32)                      # (L, D), VMEM resident

    # ----------------- Router: token mean -> MLP -> relu(tanh(.)) -------------
    m = jnp.mean(x, axis=0, keepdims=True)                # (1, D) per-sequence mean
    h = jnp.dot(m, rw1_ref[...], preferred_element_type=jnp.float32) + rb1_ref[...]
    h = jnp.maximum(h, 0.0)                               # ReLU
    g = jnp.dot(h, rw2_ref[...], preferred_element_type=jnp.float32) + rb2_ref[...]
    g = jnp.maximum(jnp.tanh(g), 0.0)                     # activateFunc = relu(tanh(x))
    p_ref[0] = g.astype(p_ref.dtype)

    # ----------------- Multi-head self-attention (within this sequence) -------
    # Fused QKV projection: one (L, D) @ (D, 3*Hd) matmul.
    qkv = jnp.dot(x, wqkv_ref[...], preferred_element_type=jnp.float32) + bqkv_ref[...]
    q = qkv[:, :Hd] * scale                               # fold 1/sqrt(dh) into q
    k = qkv[:, Hd:2 * Hd]
    v = qkv[:, 2 * Hd:]

    ctx_parts = []
    for hh in range(num_heads):                           # static unroll (few heads)
        lo, hi = hh * dh, (hh + 1) * dh
        qh, kh, vh = q[:, lo:hi], k[:, lo:hi], v[:, lo:hi]     # (L, dh) lane slices
        # scores: contract on the last (lane) dim of both operands — no transposes
        s = lax.dot_general(qh, kh, (((1,), (1,)), ((), ())),
                            preferred_element_type=jnp.float32)    # (L, L)
        s = s - jnp.max(s, axis=-1, keepdims=True)
        e = jnp.exp(s)
        inv = pl.reciprocal(jnp.sum(e, axis=-1, keepdims=True), approx=True)
        pattn = e * inv                                   # softmax rows
        ctx_parts.append(jnp.dot(pattn, vh, preferred_element_type=jnp.float32))

    # Merge heads along lanes -> single output projection (contraction dim = Hd).
    ctx = jnp.concatenate(ctx_parts, axis=1)              # (L, Hd)
    out = jnp.dot(ctx, wo_ref[...], preferred_element_type=jnp.float32) + bo_ref[...]

    # Residual add + LayerNorm over the embedding dim.
    y = out + x
    mu = jnp.mean(y, axis=-1, keepdims=True)
    var = jnp.mean((y - mu) ** 2, axis=-1, keepdims=True)
    ynorm = (y - mu) * lax.rsqrt(var + eps)
    o_ref[0] = (ynorm * gamma_ref[...] + beta_ref[...]).astype(o_ref.dtype)


# ----------------------------------------------------------------------------
# Wrapper: single pallas_call, grid over sequences (parallel -> both v7x TCs)
# ----------------------------------------------------------------------------
def _imrc_forward(x3, params, num_heads, eps=1e-5):
    B, L, D = x3.shape
    Hr = params['r_w1'].shape[1]
    P = params['r_w2'].shape[1]
    Hd3 = params['wqkv'].shape[1]
    Hd = Hd3 // 3

    def wspec(shape):
        nd = len(shape)
        # Constant block index -> weight is DMA'd once and stays VMEM-resident.
        return pl.BlockSpec(shape, lambda b, _nd=nd: (0,) * _nd)

    kernel = partial(_imrc_kernel, num_heads=num_heads, eps=eps)
    sa, pp = pl.pallas_call(
        kernel,
        grid=(B,),
        out_shape=(jax.ShapeDtypeStruct((B, L, D), x3.dtype),
                   jax.ShapeDtypeStruct((B, 1, P), x3.dtype)),
        in_specs=[
            pl.BlockSpec((1, L, D), lambda b: (b, 0, 0)),
            wspec((D, Hr)), wspec((1, Hr)),
            wspec((Hr, P)), wspec((1, P)),
            wspec((D, Hd3)), wspec((1, Hd3)),
            wspec((Hd, D)), wspec((1, D)),
            wspec((1, D)), wspec((1, D)),
        ],
        out_specs=(pl.BlockSpec((1, L, D), lambda b: (b, 0, 0)),
                   pl.BlockSpec((1, 1, P), lambda b: (b, 0, 0))),
        compiler_params=pltpu.CompilerParams(
            dimension_semantics=("parallel",)),
    )(x3, params['r_w1'], params['r_b1'], params['r_w2'], params['r_b2'],
      params['wqkv'], params['bqkv'], params['wo'], params['bo'],
      params['gamma'], params['beta'])
    return sa, pp.reshape(B, P)


@partial(jax.jit, static_argnums=(2,))
def intra_model_reasoning_cell(inp, params, num_heads):
    """Forward pass. inp: (n_img, n_stc, n_local, D) or (B, n_local, D)."""
    # TODO(synk): if the surrounding model calls this cell many times per step
    # (per layer / per routing iteration), fold those calls into one pallas_call
    # by extending the grid — at these shapes per-call overhead dominates.
    if inp.ndim == 4:
        n_img, n_stc, L, D = inp.shape
        B = n_img * n_stc
        x3 = inp.reshape(B, L, D)              # free reshape outside the kernel
    else:
        B, L, D = inp.shape
        x3 = inp
    sa, pp = _imrc_forward(x3, params, num_heads)
    if inp.ndim == 4:
        return sa.reshape(n_img, n_stc, L, D), pp.reshape(n_img, n_stc, -1)
    return sa, pp


# ----------------------------------------------------------------------------
# Parameter init (deterministic, synthetic). QKV weights packed at init time.
# ----------------------------------------------------------------------------
def init_params(key, embed_size, hid_router, num_out_path, hid_imrc):
    ks = jax.random.split(key, 8)
    s = 0.02
    wq = jax.random.normal(ks[2], (embed_size, hid_imrc), jnp.float32) * s
    wk = jax.random.normal(ks[3], (embed_size, hid_imrc), jnp.float32) * s
    wv = jax.random.normal(ks[4], (embed_size, hid_imrc), jnp.float32) * s
    return {
        # Router MLP
        'r_w1': jax.random.normal(ks[0], (embed_size, hid_router), jnp.float32) * s,
        'r_b1': jnp.zeros((1, hid_router), jnp.float32),
        'r_w2': jax.random.normal(ks[1], (hid_router, num_out_path), jnp.float32) * s,
        'r_b2': jnp.full((1, num_out_path), 1.5, jnp.float32),   # DIME: bias filled with 1.5
        # Self-attention (Q|K|V packed once, not per forward)
        'wqkv': jnp.concatenate([wq, wk, wv], axis=1),           # (D, 3*Hd)
        'bqkv': jnp.zeros((1, 3 * hid_imrc), jnp.float32),
        'wo': jax.random.normal(ks[5], (hid_imrc, embed_size), jnp.float32) * s,
        'bo': jnp.zeros((1, embed_size), jnp.float32),
        'gamma': jnp.ones((1, embed_size), jnp.float32),
        'beta': jnp.zeros((1, embed_size), jnp.float32),
    }


# ----------------------------------------------------------------------------
# Pure-JAX reference (correctness check)
# ----------------------------------------------------------------------------
def _reference(inp, p, num_heads, eps=1e-5):
    n_img, n_stc, L, D = inp.shape
    x = inp.reshape(-1, L, D)
    m = x.mean(axis=1)
    h = jnp.maximum(m @ p['r_w1'] + p['r_b1'], 0.0)
    g = jnp.maximum(jnp.tanh(h @ p['r_w2'] + p['r_b2']), 0.0)
    Hd = p['wo'].shape[0]
    wq, wk, wv = p['wqkv'][:, :Hd], p['wqkv'][:, Hd:2 * Hd], p['wqkv'][:, 2 * Hd:]
    bq, bk, bv = p['bqkv'][:, :Hd], p['bqkv'][:, Hd:2 * Hd], p['bqkv'][:, 2 * Hd:]
    q = x @ wq + bq
    k = x @ wk + bk
    v = x @ wv + bv
    B = x.shape[0]
    dh = Hd // num_heads
    qh = q.reshape(B, L, num_heads, dh)
    kh = k.reshape(B, L, num_heads, dh)
    vh = v.reshape(B, L, num_heads, dh)
    sc = jnp.einsum('blhd,bkhd->bhlk', qh, kh) / math.sqrt(dh)
    pr = jax.nn.softmax(sc, axis=-1)
    ctx = jnp.einsum('bhlk,bkhd->blhd', pr, vh).reshape(B, L, Hd)
    out = ctx @ p['wo'] + p['bo'] + x
    mu = out.mean(-1, keepdims=True)
    var = ((out - mu) ** 2).mean(-1, keepdims=True)
    y = (out - mu) / jnp.sqrt(var + eps) * p['gamma'] + p['beta']
    return y.reshape(n_img, n_stc, L, D), g.reshape(n_img, n_stc, -1)


if __name__ == "__main__":
    # args: embed_size=32, hid_router=16, hid_IMRC=32, num_head_IMRC=4, num_out_path=4
    embed_size, hid_router, hid_imrc, num_heads, num_out_path = 32, 16, 32, 4, 4
    n_img, n_stc, n_local = 2, 3, 8

    key = jax.random.PRNGKey(0)
    k_in, k_par = jax.random.split(key)
    inp = jax.random.normal(k_in, (n_img, n_stc, n_local, embed_size), jnp.float32)
    params = init_params(k_par, embed_size, hid_router, num_out_path, hid_imrc)

    sa_emb, path_prob = intra_model_reasoning_cell(inp, params, num_heads)
    sa_emb = jax.block_until_ready(sa_emb)
    path_prob = jax.block_until_ready(path_prob)

    assert sa_emb.shape == (n_img, n_stc, n_local, embed_size)
    assert path_prob.shape == (n_img, n_stc, num_out_path)

    ref_sa, ref_pp = _reference(inp, params, num_heads)
    # sa uses approx reciprocal in the softmax -> slightly looser tolerance.
    assert jnp.allclose(sa_emb, ref_sa, atol=2e-3, rtol=2e-3), \
        float(jnp.max(jnp.abs(sa_emb - ref_sa)))
    assert jnp.allclose(path_prob, ref_pp, atol=1e-4, rtol=1e-4), \
        float(jnp.max(jnp.abs(path_prob - ref_pp)))

    print("KERNEL_OK")
</pallas_src>

<mosaic_0001>
module attributes {stable_mosaic.version = 11 : i64} {
  func.func @_imrc_kernel(%arg0: i32, %arg1: memref<1x8x32xf32, #tpu.memory_space<vmem>>, %arg2: memref<32x16xf32, #tpu.memory_space<vmem>>, %arg3: memref<1x16xf32, #tpu.memory_space<vmem>>, %arg4: memref<16x4xf32, #tpu.memory_space<vmem>>, %arg5: memref<1x4xf32, #tpu.memory_space<vmem>>, %arg6: memref<32x96xf32, #tpu.memory_space<vmem>>, %arg7: memref<1x96xf32, #tpu.memory_space<vmem>>, %arg8: memref<32x32xf32, #tpu.memory_space<vmem>>, %arg9: memref<1x32xf32, #tpu.memory_space<vmem>>, %arg10: memref<1x32xf32, #tpu.memory_space<vmem>>, %arg11: memref<1x32xf32, #tpu.memory_space<vmem>>, %arg12: memref<1x8x32xf32, #tpu.memory_space<vmem>>, %arg13: memref<1x1x4xf32, #tpu.memory_space<vmem>>) attributes {dimension_semantics = [#tpu.dimension_semantics<parallel>], iteration_bounds = array<i64: 6>, scalar_prefetch = 0 : i64, scratch_operands = 0 : i64, tpu.core_type = #tpu.core_type<tc>, window_params = [{transform_indices = @transform_0, window_bounds = array<i64: 1, 8, 32>}, {pipeline_mode = #tpu.pipeline_mode<synchronous>, transform_indices = @transform_1, window_bounds = array<i64: 32, 16>}, {pipeline_mode = #tpu.pipeline_mode<synchronous>, transform_indices = @transform_2, window_bounds = array<i64: 1, 16>}, {pipeline_mode = #tpu.pipeline_mode<synchronous>, transform_indices = @transform_3, window_bounds = array<i64: 16, 4>}, {pipeline_mode = #tpu.pipeline_mode<synchronous>, transform_indices = @transform_4, window_bounds = array<i64: 1, 4>}, {pipeline_mode = #tpu.pipeline_mode<synchronous>, transform_indices = @transform_5, window_bounds = array<i64: 32, 96>}, {pipeline_mode = #tpu.pipeline_mode<synchronous>, transform_indices = @transform_6, window_bounds = array<i64: 1, 96>}, {pipeline_mode = #tpu.pipeline_mode<synchronous>, transform_indices = @transform_7, window_bounds = array<i64: 32, 32>}, {pipeline_mode = #tpu.pipeline_mode<synchronous>, transform_indices = @transform_8, window_bounds = array<i64: 1, 32>}, {pipeline_mode = #tpu.pipeline_mode<synchronous>, transform_indices = @transform_9, window_bounds = array<i64: 1, 32>}, {pipeline_mode = #tpu.pipeline_mode<synchronous>, transform_indices = @transform_10, window_bounds = array<i64: 1, 32>}, {transform_indices = @transform_11, window_bounds = array<i64: 1, 8, 32>}, {transform_indices = @transform_12, window_bounds = array<i64: 1, 1, 4>}]} {
    %c0 = arith.constant 0 : index
    %c0_0 = arith.constant 0 : index
    %c0_1 = arith.constant 0 : index
    %0 = vector.load %arg1[%c0, %c0_0, %c0_1] : memref<1x8x32xf32, #tpu.memory_space<vmem>>, vector<1x8x32xf32>
    %1 = vector.shape_cast %0 : vector<1x8x32xf32> to vector<8x32xf32>
    %cst = arith.constant dense<0.000000e+00> : vector<32xf32>
    %2 = vector.multi_reduction <add>, %1, %cst [0] : vector<8x32xf32> to vector<32xf32>
    %3 = vector.shape_cast %2 : vector<32xf32> to vector<1x32xf32>
    %cst_2 = arith.constant 8.000000e+00 : f32
    %4 = vector.broadcast %cst_2 : f32 to vector<1x32xf32>
    %5 = arith.divf %3, %4 : vector<1x32xf32>
    %c0_3 = arith.constant 0 : index
    %c0_4 = arith.constant 0 : index
    %6 = vector.load %arg2[%c0_3, %c0_4] : memref<32x16xf32, #tpu.memory_space<vmem>>, vector<32x16xf32>
    %cst_5 = arith.constant dense<0.000000e+00> : vector<1x16xf32>
    %7 = tpu.matmul %5, %6, %cst_5 {dimension_numbers = #tpu.dot_dimension_numbers<[1], [0], [0], [1], [0, 0, 1, 1], [], []>} : vector<1x32xf32>, vector<32x16xf32>, vector<1x16xf32> -> vector<1x16xf32>
    %c0_6 = arith.constant 0 : index
    %c0_7 = arith.constant 0 : index
    %8 = vector.load %arg3[%c0_6, %c0_7] : memref<1x16xf32, #tpu.memory_space<vmem>>, vector<1x16xf32>
    %9 = arith.addf %7, %8 : vector<1x16xf32>
    %cst_8 = arith.constant 0.000000e+00 : f32
    %10 = vector.broadcast %cst_8 : f32 to vector<1x16xf32>
    %11 = arith.maximumf %9, %10 : vector<1x16xf32>
    %c0_9 = arith.constant 0 : index
    %c0_10 = arith.constant 0 : index
    %12 = vector.load %arg4[%c0_9, %c0_10] : memref<16x4xf32, #tpu.memory_space<vmem>>, vector<16x4xf32>
    %cst_11 = arith.constant dense<0.000000e+00> : vector<1x4xf32>
    %13 = tpu.matmul %11, %12, %cst_11 {dimension_numbers = #tpu.dot_dimension_numbers<[1], [0], [0], [1], [0, 0, 1, 1], [], []>} : vector<1x16xf32>, vector<16x4xf32>, vector<1x4xf32> -> vector<1x4xf32>
    %c0_12 = arith.constant 0 : index
    %c0_13 = arith.constant 0 : index
    %14 = vector.load %arg5[%c0_12, %c0_13] : memref<1x4xf32, #tpu.memory_space<vmem>>, vector<1x4xf32>
    %15 = arith.addf %13, %14 : vector<1x4xf32>
    %16 = math.tanh %15 : vector<1x4xf32>
    %cst_14 = arith.constant 0.000000e+00 : f32
    %17 = vector.broadcast %cst_14 : f32 to vector<1x4xf32>
    %18 = arith.maximumf %16, %17 : vector<1x4xf32>
    %c0_15 = arith.constant 0 : index
    %c0_16 = arith.constant 0 : index
    %c0_17 = arith.constant 0 : index
    %19 = vector.load %arg13[%c0_15, %c0_16, %c0_17] : memref<1x1x4xf32, #tpu.memory_space<vmem>>, vector<1x1x4xf32>
    %20 = vector.shape_cast %19 : vector<1x1x4xf32> to vector<1x4xf32>
    %21 = vector.shape_cast %18 : vector<1x4xf32> to vector<1x1x4xf32>
    tpu.vector_store %arg13[%c0_15, %c0_16, %c0_17], %21 {strides = array<i32>} : memref<1x1x4xf32, #tpu.memory_space<vmem>>, vector<1x1x4xf32>,
    %c0_18 = arith.constant 0 : index
    %c0_19 = arith.constant 0 : index
    %22 = vector.load %arg6[%c0_18, %c0_19] : memref<32x96xf32, #tpu.memory_space<vmem>>, vector<32x96xf32>
    %cst_20 = arith.constant dense<0.000000e+00> : vector<8x96xf32>
    %23 = tpu.matmul %1, %22, %cst_20 {dimension_numbers = #tpu.dot_dimension_numbers<[1], [0], [0], [1], [0, 0, 1, 1], [], []>} : vector<8x32xf32>, vector<32x96xf32>, vector<8x96xf32> -> vector<8x96xf32>
    %c0_21 = arith.constant 0 : index
    %c0_22 = arith.constant 0 : index
    %24 = vector.load %arg7[%c0_21, %c0_22] : memref<1x96xf32, #tpu.memory_space<vmem>>, vector<1x96xf32>
    %25 = vector.broadcast %24 : vector<1x96xf32> to vector<8x96xf32>
    %26 = arith.addf %23, %25 : vector<8x96xf32>
    %27 = vector.extract_strided_slice %26 {offsets = [0, 0], sizes = [8, 32], strides = [1, 1]} : vector<8x96xf32> to vector<8x32xf32>
    %cst_23 = arith.constant 0.353553385 : f32
    %28 = vector.broadcast %cst_23 : f32 to vector<8x32xf32>
    %29 = arith.mulf %27, %28 : vector<8x32xf32>
    %30 = vector.extract_strided_slice %26 {offsets = [0, 32], sizes = [8, 32], strides = [1, 1]} : vector<8x96xf32> to vector<8x32xf32>
    %31 = vector.extract_strided_slice %26 {offsets = [0, 64], sizes = [8, 32], strides = [1, 1]} : vector<8x96xf32> to vector<8x32xf32>
    %32 = vector.extract_strided_slice %29 {offsets = [0, 0], sizes = [8, 8], strides = [1, 1]} : vector<8x32xf32> to vector<8x8xf32>
    %33 = vector.extract_strided_slice %30 {offsets = [0, 0], sizes = [8, 8], strides = [1, 1]} : vector<8x32xf32> to vector<8x8xf32>
    %34 = vector.extract_strided_slice %31 {offsets = [0, 0], sizes = [8, 8], strides = [1, 1]} : vector<8x32xf32> to vector<8x8xf32>
    %cst_24 = arith.constant dense<0.000000e+00> : vector<8x8xf32>
    %35 = tpu.matmul %32, %33, %cst_24 {dimension_numbers = #tpu.dot_dimension_numbers<[1], [1], [0], [0], [0, 0, 1, 0], [], []>} : vector<8x8xf32>, vector<8x8xf32>, vector<8x8xf32> -> vector<8x8xf32>
    %cst_25 = arith.constant dense<0xFF800000> : vector<8xf32>
    %36 = vector.multi_reduction <maximumf>, %35, %cst_25 [1] : vector<8x8xf32> to vector<8xf32>
    %37 = vector.shape_cast %36 : vector<8xf32> to vector<8x1xf32>
    %38 = vector.broadcast %37 : vector<8x1xf32> to vector<8x8xf32>
    %39 = arith.subf %35, %38 : vector<8x8xf32>
    %40 = math.exp %39 : vector<8x8xf32>
    %cst_26 = arith.constant dense<0.000000e+00> : vector<8xf32>
    %41 = vector.multi_reduction <add>, %40, %cst_26 [1] : vector<8x8xf32> to vector<8xf32>
    %42 = vector.shape_cast %41 : vector<8xf32> to vector<8x1xf32>
    %43 = tpu.reciprocal %42 {approx = true} : vector<8x1xf32> -> vector<8x1xf32>
    %44 = vector.broadcast %43 : vector<8x1xf32> to vector<8x8xf32>
    %45 = arith.mulf %40, %44 : vector<8x8xf32>
    %cst_27 = arith.constant dense<0.000000e+00> : vector<8x8xf32>
    %46 = tpu.matmul %45, %34, %cst_27 {dimension_numbers = #tpu.dot_dimension_numbers<[1], [0], [0], [1], [0, 0, 1, 1], [], []>} : vector<8x8xf32>, vector<8x8xf32>, vector<8x8xf32> -> vector<8x8xf32>
    %47 = vector.extract_strided_slice %29 {offsets = [0, 8], sizes = [8, 8], strides = [1, 1]} : vector<8x32xf32> to vector<8x8xf32>
    %48 = vector.extract_strided_slice %30 {offsets = [0, 8], sizes = [8, 8], strides = [1, 1]} : vector<8x32xf32> to vector<8x8xf32>
    %49 = vector.extract_strided_slice %31 {offsets = [0, 8], sizes = [8, 8], strides = [1, 1]} : vector<8x32xf32> to vector<8x8xf32>
    %cst_28 = arith.constant dense<0.000000e+00> : vector<8x8xf32>
    %50 = tpu.matmul %47, %48, %cst_28 {dimension_numbers = #tpu.dot_dimension_numbers<[1], [1], [0], [0], [0, 0, 1, 0], [], []>} : vector<8x8xf32>, vector<8x8xf32>, vector<8x8xf32> -> vector<8x8xf32>
    %cst_29 = arith.constant dense<0xFF800000> : vector<8xf32>
    %51 = vector.multi_reduction <maximumf>, %50, %cst_29 [1] : vector<8x8xf32> to vector<8xf32>
    %52 = vector.shape_cast %51 : vector<8xf32> to vector<8x1xf32>
    %53 = vector.broadcast %52 : vector<8x1xf32> to vector<8x8xf32>
    %54 = arith.subf %50, %53 : vector<8x8xf32>
    %55 = math.exp %54 : vector<8x8xf32>
    %cst_30 = arith.constant dense<0.000000e+00> : vector<8xf32>
    %56 = vector.multi_reduction <add>, %55, %cst_30 [1] : vector<8x8xf32> to vector<8xf32>
    %57 = vector.shape_cast %56 : vector<8xf32> to vector<8x1xf32>
    %58 = tpu.reciprocal %57 {approx = true} : vector<8x1xf32> -> vector<8x1xf32>
    %59 = vector.broadcast %58 : vector<8x1xf32> to vector<8x8xf32>
    %60 = arith.mulf %55, %59 : vector<8x8xf32>
    %cst_31 = arith.constant dense<0.000000e+00> : vector<8x8xf32>
    %61 = tpu.matmul %60, %49, %cst_31 {dimension_numbers = #tpu.dot_dimension_numbers<[1], [0], [0], [1], [0, 0, 1, 1], [], []>} : vector<8x8xf32>, vector<8x8xf32>, vector<8x8xf32> -> vector<8x8xf32>
    %62 = vector.extract_strided_slice %29 {offsets = [0, 16], sizes = [8, 8], strides = [1, 1]} : vector<8x32xf32> to vector<8x8xf32>
    %63 = vector.extract_strided_slice %30 {offsets = [0, 16], sizes = [8, 8], strides = [1, 1]} : vector<8x32xf32> to vector<8x8xf32>
    %64 = vector.extract_strided_slice %31 {offsets = [0, 16], sizes = [8, 8], strides = [1, 1]} : vector<8x32xf32> to vector<8x8xf32>
    %cst_32 = arith.constant dense<0.000000e+00> : vector<8x8xf32>
    %65 = tpu.matmul %62, %63, %cst_32 {dimension_numbers = #tpu.dot_dimension_numbers<[1], [1], [0], [0], [0, 0, 1, 0], [], []>} : vector<8x8xf32>, vector<8x8xf32>, vector<8x8xf32> -> vector<8x8xf32>
    %cst_33 = arith.constant dense<0xFF800000> : vector<8xf32>
    %66 = vector.multi_reduction <maximumf>, %65, %cst_33 [1] : vector<8x8xf32> to vector<8xf32>
    %67 = vector.shape_cast %66 : vector<8xf32> to vector<8x1xf32>
    %68 = vector.broadcast %67 : vector<8x1xf32> to vector<8x8xf32>
    %69 = arith.subf %65, %68 : vector<8x8xf32>
    %70 = math.exp %69 : vector<8x8xf32>
    %cst_34 = arith.constant dense<0.000000e+00> : vector<8xf32>
    %71 = vector.multi_reduction <add>, %70, %cst_34 [1] : vector<8x8xf32> to vector<8xf32>
    %72 = vector.shape_cast %71 : vector<8xf32> to vector<8x1xf32>
    %73 = tpu.reciprocal %72 {approx = true} : vector<8x1xf32> -> vector<8x1xf32>
    %74 = vector.broadcast %73 : vector<8x1xf32> to vector<8x8xf32>
    %75 = arith.mulf %70, %74 : vector<8x8xf32>
    %cst_35 = arith.constant dense<0.000000e+00> : vector<8x8xf32>
    %76 = tpu.matmul %75, %64, %cst_35 {dimension_numbers = #tpu.dot_dimension_numbers<[1], [0], [0], [1], [0, 0, 1, 1], [], []>} : vector<8x8xf32>, vector<8x8xf32>, vector<8x8xf32> -> vector<8x8xf32>
    %77 = vector.extract_strided_slice %29 {offsets = [0, 24], sizes = [8, 8], strides = [1, 1]} : vector<8x32xf32> to vector<8x8xf32>
    %78 = vector.extract_strided_slice %30 {offsets = [0, 24], sizes = [8, 8], strides = [1, 1]} : vector<8x32xf32> to vector<8x8xf32>
    %79 = vector.extract_strided_slice %31 {offsets = [0, 24], sizes = [8, 8], strides = [1, 1]} : vector<8x32xf32> to vector<8x8xf32>
    %cst_36 = arith.constant dense<0.000000e+00> : vector<8x8xf32>
    %80 = tpu.matmul %77, %78, %cst_36 {dimension_numbers = #tpu.dot_dimension_numbers<[1], [1], [0], [0], [0, 0, 1, 0], [], []>} : vector<8x8xf32>, vector<8x8xf32>, vector<8x8xf32> -> vector<8x8xf32>
    %cst_37 = arith.constant dense<0xFF800000> : vector<8xf32>
    %81 = vector.multi_reduction <maximumf>, %80, %cst_37 [1] : vector<8x8xf32> to vector<8xf32>
    %82 = vector.shape_cast %81 : vector<8xf32> to vector<8x1xf32>
    %83 = vector.broadcast %82 : vector<8x1xf32> to vector<8x8xf32>
    %84 = arith.subf %80, %83 : vector<8x8xf32>
    %85 = math.exp %84 : vector<8x8xf32>
    %cst_38 = arith.constant dense<0.000000e+00> : vector<8xf32>
    %86 = vector.multi_reduction <add>, %85, %cst_38 [1] : vector<8x8xf32> to vector<8xf32>
    %87 = vector.shape_cast %86 : vector<8xf32> to vector<8x1xf32>
    %88 = tpu.reciprocal %87 {approx = true} : vector<8x1xf32> -> vector<8x1xf32>
    %89 = vector.broadcast %88 : vector<8x1xf32> to vector<8x8xf32>
    %90 = arith.mulf %85, %89 : vector<8x8xf32>
    %cst_39 = arith.constant dense<0.000000e+00> : vector<8x8xf32>
    %91 = tpu.matmul %90, %79, %cst_39 {dimension_numbers = #tpu.dot_dimension_numbers<[1], [0], [0], [1], [0, 0, 1, 1], [], []>} : vector<8x8xf32>, vector<8x8xf32>, vector<8x8xf32> -> vector<8x8xf32>
    %92 = tpu.concatenate %46, %61, %76, %91 in 1 : vector<8x8xf32>, vector<8x8xf32>, vector<8x8xf32>, vector<8x8xf32> -> vector<8x32xf32>
    %c0_40 = arith.constant 0 : index
    %c0_41 = arith.constant 0 : index
    %93 = vector.load %arg8[%c0_40, %c0_41] : memref<32x32xf32, #tpu.memory_space<vmem>>, vector<32x32xf32>
    %cst_42 = arith.constant dense<0.000000e+00> : vector<8x32xf32>
    %94 = tpu.matmul %92, %93, %cst_42 {dimension_numbers = #tpu.dot_dimension_numbers<[1], [0], [0], [1], [0, 0, 1, 1], [], []>} : vector<8x32xf32>, vector<32x32xf32>, vector<8x32xf32> -> vector<8x32xf32>
    %c0_43 = arith.constant 0 : index
    %c0_44 = arith.constant 0 : index
    %95 = vector.load %arg9[%c0_43, %c0_44] : memref<1x32xf32, #tpu.memory_space<vmem>>, vector<1x32xf32>
    %96 = vector.broadcast %95 : vector<1x32xf32> to vector<8x32xf32>
    %97 = arith.addf %94, %96 : vector<8x32xf32>
    %98 = arith.addf %97, %1 : vector<8x32xf32>
    %cst_45 = arith.constant dense<0.000000e+00> : vector<8xf32>
    %99 = vector.multi_reduction <add>, %98, %cst_45 [1] : vector<8x32xf32> to vector<8xf32>
    %100 = vector.shape_cast %99 : vector<8xf32> to vector<8x1xf32>
    %cst_46 = arith.constant 3.200000e+01 : f32
    %101 = vector.broadcast %cst_46 : f32 to vector<8x1xf32>
    %102 = arith.divf %100, %101 : vector<8x1xf32>
    %103 = vector.broadcast %102 : vector<8x1xf32> to vector<8x32xf32>
    %104 = arith.subf %98, %103 : vector<8x32xf32>
    %105 = arith.mulf %104, %104 : vector<8x32xf32>
    %cst_47 = arith.constant dense<0.000000e+00> : vector<8xf32>
    %106 = vector.multi_reduction <add>, %105, %cst_47 [1] : vector<8x32xf32> to vector<8xf32>
    %107 = vector.shape_cast %106 : vector<8xf32> to vector<8x1xf32>
    %cst_48 = arith.constant 3.200000e+01 : f32
    %108 = vector.broadcast %cst_48 : f32 to vector<8x1xf32>
    %109 = arith.divf %107, %108 : vector<8x1xf32>
    %110 = vector.broadcast %102 : vector<8x1xf32> to vector<8x32xf32>
    %111 = arith.subf %98, %110 : vector<8x32xf32>
    %cst_49 = arith.constant 9.99999974E-6 : f32
    %112 = vector.broadcast %cst_49 : f32 to vector<8x1xf32>
    %113 = arith.addf %109, %112 : vector<8x1xf32>
    %114 = math.rsqrt %113 : vector<8x1xf32>
    %115 = vector.broadcast %114 : vector<8x1xf32> to vector<8x32xf32>
    %116 = arith.mulf %111, %115 : vector<8x32xf32>
    %c0_50 = arith.constant 0 : index
    %c0_51 = arith.constant 0 : index
    %117 = vector.load %arg10[%c0_50, %c0_51] : memref<1x32xf32, #tpu.memory_space<vmem>>, vector<1x32xf32>
    %118 = vector.broadcast %117 : vector<1x32xf32> to vector<8x32xf32>
    %119 = arith.mulf %116, %118 : vector<8x32xf32>
    %c0_52 = arith.constant 0 : index
    %c0_53 = arith.constant 0 : index
    %120 = vector.load %arg11[%c0_52, %c0_53] : memref<1x32xf32, #tpu.memory_space<vmem>>, vector<1x32xf32>
    %121 = vector.broadcast %120 : vector<1x32xf32> to vector<8x32xf32>
    %122 = arith.addf %119, %121 : vector<8x32xf32>
    %c0_54 = arith.constant 0 : index
    %c0_55 = arith.constant 0 : index
    %c0_56 = arith.constant 0 : index
    %123 = vector.load %arg12[%c0_54, %c0_55, %c0_56] : memref<1x8x32xf32, #tpu.memory_space<vmem>>, vector<1x8x32xf32>
    %124 = vector.shape_cast %123 : vector<1x8x32xf32> to vector<8x32xf32>
    %125 = vector.shape_cast %122 : vector<8x32xf32> to vector<1x8x32xf32>
    tpu.vector_store %arg12[%c0_54, %c0_55, %c0_56], %125 {strides = array<i32>} : memref<1x8x32xf32, #tpu.memory_space<vmem>>, vector<1x8x32xf32>,
    return
  }
  func.func @transform_0(%arg0: i32) -> (i32, i32, i32) {
    %c0_i32 = arith.constant 0 : i32
    %c0_i32_0 = arith.constant 0 : i32
    %c0_i32_1 = arith.constant 0 : i32
    return %arg0, %c0_i32, %c0_i32_0 : i32, i32, i32
  }
  func.func @transform_1(%arg0: i32) -> (i32, i32) {
    %c0_i32 = arith.constant 0 : i32
    %c0_i32_0 = arith.constant 0 : i32
    %c0_i32_1 = arith.constant 0 : i32
    return %c0_i32, %c0_i32_0 : i32, i32
  }
  func.func @transform_2(%arg0: i32) -> (i32, i32) {
    %c0_i32 = arith.constant 0 : i32
    %c0_i32_0 = arith.constant 0 : i32
    %c0_i32_1 = arith.constant 0 : i32
    return %c0_i32, %c0_i32_0 : i32, i32
  }
  func.func @transform_3(%arg0: i32) -> (i32, i32) {
    %c0_i32 = arith.constant 0 : i32
    %c0_i32_0 = arith.constant 0 : i32
    %c0_i32_1 = arith.constant 0 : i32
    return %c0_i32, %c0_i32_0 : i32, i32
  }
  func.func @transform_4(%arg0: i32) -> (i32, i32) {
    %c0_i32 = arith.constant 0 : i32
    %c0_i32_0 = arith.constant 0 : i32
    %c0_i32_1 = arith.constant 0 : i32
    return %c0_i32, %c0_i32_0 : i32, i32
  }
  func.func @transform_5(%arg0: i32) -> (i32, i32) {
    %c0_i32 = arith.constant 0 : i32
    %c0_i32_0 = arith.constant 0 : i32
    %c0_i32_1 = arith.constant 0 : i32
    return %c0_i32, %c0_i32_0 : i32, i32
  }
  func.func @transform_6(%arg0: i32) -> (i32, i32) {
    %c0_i32 = arith.constant 0 : i32
    %c0_i32_0 = arith.constant 0 : i32
    %c0_i32_1 = arith.constant 0 : i32
    return %c0_i32, %c0_i32_0 : i32, i32
  }
  func.func @transform_7(%arg0: i32) -> (i32, i32) {
    %c0_i32 = arith.constant 0 : i32
    %c0_i32_0 = arith.constant 0 : i32
    %c0_i32_1 = arith.constant 0 : i32
    return %c0_i32, %c0_i32_0 : i32, i32
  }
  func.func @transform_8(%arg0: i32) -> (i32, i32) {
    %c0_i32 = arith.constant 0 : i32
    %c0_i32_0 = arith.constant 0 : i32
    %c0_i32_1 = arith.constant 0 : i32
    return %c0_i32, %c0_i32_0 : i32, i32
  }
  func.func @transform_9(%arg0: i32) -> (i32, i32) {
    %c0_i32 = arith.constant 0 : i32
    %c0_i32_0 = arith.constant 0 : i32
    %c0_i32_1 = arith.constant 0 : i32
    return %c0_i32, %c0_i32_0 : i32, i32
  }
  func.func @transform_10(%arg0: i32) -> (i32, i32) {
    %c0_i32 = arith.constant 0 : i32
    %c0_i32_0 = arith.constant 0 : i32
    %c0_i32_1 = arith.constant 0 : i32
    return %c0_i32, %c0_i32_0 : i32, i32
  }
  func.func @transform_11(%arg0: i32) -> (i32, i32, i32) {
    %c0_i32 = arith.constant 0 : i32
    %c0_i32_0 = arith.constant 0 : i32
    %c0_i32_1 = arith.constant 0 : i32
    return %arg0, %c0_i32, %c0_i32_0 : i32, i32, i32
  }
  func.func @transform_12(%arg0: i32) -> (i32, i32, i32) {
    %c0_i32 = arith.constant 0 : i32
    %c0_i32_0 = arith.constant 0 : i32
    %c0_i32_1 = arith.constant 0 : i32
    return %arg0, %c0_i32, %c0_i32_0 : i32, i32, i32
  }
}

</mosaic_0001>

<llo_original>
// kernel: intra_model_reasoning_cell.1
$region0: #{intra_model_reasoning_cell.1}
  #allocation0 [shape = 'u32[]', space=smem, size = 0x4, offset = 0x4, fixed_abs, tag = 'smem constant byte address 0x4 - core index']
  #allocation1 [shape = 'u32[144,128]{1,0:T(1,128)}', space=vmem, size = 0x12000, scoped, tag = 'internal scratch']
  %s0 = inlined_call_operand.vmem [shape: f32[6,8,32], index: 0, kind: input, shape index: {}]
  %s1 = inlined_call_operand.vmem [shape: f32[32,16], index: 1, kind: input, shape index: {}]
  %s2 = inlined_call_operand.vmem [shape: f32[1,16], index: 2, kind: input, shape index: {}]
  %s3 = inlined_call_operand.vmem [shape: f32[16,4], index: 3, kind: input, shape index: {}]
  %s4 = inlined_call_operand.vmem [shape: f32[1,4], index: 4, kind: input, shape index: {}]
  %s5 = inlined_call_operand.vmem [shape: f32[32,96], index: 5, kind: input, shape index: {}]
  %s6 = inlined_call_operand.hbm [shape: f32[1,96], index: 6, kind: input, shape index: {}]
  %s7 = inlined_call_operand.hbm [shape: f32[32,32], index: 7, kind: input, shape index: {}]
  %s8 = inlined_call_operand.hbm [shape: f32[1,32], index: 8, kind: input, shape index: {}]
  %s9 = inlined_call_operand.hbm [shape: f32[1,32], index: 9, kind: input, shape index: {}]
  %s10 = inlined_call_operand.hbm [shape: f32[1,32], index: 10, kind: input, shape index: {}]
  %s11 = inlined_call_operand.hbm [shape: f32[6,8,32], index: 11, kind: output, shape index: {0}]
  %s12 = inlined_call_operand.vmem [shape: f32[6,1,4], index: 12, kind: output, shape index: {1}]
  %13 = xla_tuple %s11, %s12
  %s14 = sld [smem:[#allocation0]]
  $region105: #{intra_model_reasoning_cell.1} parent=0
    _
  %s16 = ssub.s32 1, %s14
  %s17 = scalar_select 0, %s16, %s14
  $region1: #{intra_model_reasoning_cell.1} parent=0
    #allocation2 [shape = 'u8[512]{0}', space=vmem, size = 0x400, scoped, tag = 'input window, operand 6, single buffered']
    #allocation3 [shape = 's32[2]{0}', space=sflag, size = 0x8, scoped, tag = 'scoped memory for intra_model_reasoning_cell.1']
    #allocation4 [shape = 's32[2]{0}', space=sflag, size = 0x8, scoped, tag = 'scoped memory for intra_model_reasoning_cell.1']
    #allocation5 [shape = 'u8[16384]{0}', space=vmem, size = 0x4000, scoped, tag = 'input window, operand 7, single buffered']
    #allocation6 [shape = 's32[1]{0}', space=sflag, size = 0x4, scoped, tag = 'scoped memory for intra_model_reasoning_cell.1']
    #allocation7 [shape = 'u8[512]{0}', space=vmem, size = 0x400, scoped, tag = 'input window, operand 8, single buffered']
    #allocation8 [shape = 'u8[512]{0}', space=vmem, size = 0x400, scoped, tag = 'input window, operand 9, single buffered']
    #allocation9 [shape = 's32[1]{0}', space=sflag, size = 0x4, scoped, tag = 'scoped memory for intra_model_reasoning_cell.1']
    #allocation10 [shape = 'u8[512]{0}', space=vmem, size = 0x400, scoped, tag = 'input window, operand 10, single buffered']
    #allocation11 [shape = 'u8[8192]{0}', space=vmem, size = 0x2000, scoped, tag = 'output window, operand 0']
    %18 = vsyncpa [#allocation3], 0
    %19 = vsyncpa [#allocation6], 0
    %20 = vsyncpa [#allocation9], 0
    %21 = vsyncpa [#allocation4], 0
    %s22 = scalar_lea.sflag [#allocation4], 1
    %23 = vsyncpa %s22, 0
    loop: start=0, step=1, limit=8
    $region2: #{intra_model_reasoning_cell.1} parent=1 // loop_pre_header
      _
    $region3: #{intra_model_reasoning_cell.1} parent=1 // loop_header
      %s25 = sphi 0, %s29
      %p26 = scmp.ge.s32.totalorder %s25, 8
      %s35 = sphi 0, %s37
      %s38 = sphi 0, %s35
      %s39 = sphi 0, %s38
      %s55 = sphi 0, %s39
      %s59 = sphi 0, %s59
      %s61 = sphi 0, %s59
      %s62 = sphi 0, %s61
      %s76 = sphi 0, %s62
      %s80 = sphi 0, %s80
      %s82 = sphi 0, %s80
      %s83 = sphi 0, %s82
      %s97 = sphi 0, %s83
      %s101 = sphi 0, %s101
      %s103 = sphi 0, %s101
      %s104 = sphi 0, %s103
      %s118 = sphi 0, %s104
      %s122 = sphi 0, %s122
      %s124 = sphi 0, %s122
      %s125 = sphi 0, %s124
      %s139 = sphi 0, %s125
      %s143 = sphi 0, %s143
      %s145 = sphi 0, %s143
      %s146 = sphi 0, %s145
      %s160 = sphi 0, %s146
      %s164 = sphi 0, %s164
      %s166 = sphi 0, %s164
      %s167 = sphi 0, %s166
      %s181 = sphi 0, %s167
      %s185 = sphi 0, %s185
      %s187 = sphi 0, %s185
      %s188 = sphi 0, %s187
      %s202 = sphi 0, %s188
      %s206 = sphi 0, %s206
      %s208 = sphi 0, %s206
      %s209 = sphi 0, %s208
      %s223 = sphi 0, %s209
      %s227 = sphi 0, %s227
      %s229 = sphi 0, %s227
      %s230 = sphi 0, %s229
      %s244 = sphi 0, %s230
      %s248 = sphi 0, %s248
      %s250 = sphi 0, %s248
      %s251 = sphi 0, %s250
      %s265 = sphi 0, %s251
      %s271 = sphi 0, %s273
      %s274 = sphi 0, %s271
      %s275 = sphi 0, %s274
      %s291 = sphi 0, %s275
      %s297 = sphi 0, %s299
      %s300 = sphi 0, %s297
      %s301 = sphi 0, %s300
      %s317 = sphi 0, %s301
    $region4: #{intra_model_reasoning_cell.1} parent=1 // loop_header_branch
      %28 = sbr.rel (%p26) target = $region8
    $region5: #{intra_model_reasoning_cell.1} parent=1 // loop_body
      %s30 = ssub.s32 %s25, 1
      %s31 = ssub.s32 %s25, 2
      %s32 = sadd.s32 %s25, 1
      %s33 = ssub.s32 %s25, %s32
      %p34 = scmp.eq.s32.totalorder %s33, 0
      %s36 = sadd.s32 %s35, 1
      %s37 = scalar_select %p34, %s35, %s36
      %p40 = pneg %p34
      %p41 = scmp.eq.s32.totalorder %s25, 5
      %p42 = por %p40, %p41
      %p43 = scmp.ne.s32.totalorder %s35, %s38
      %p44 = scmp.eq.s32.totalorder %s25, 0
      %p45 = por %p43, %p44
      %p46 = scmp.ne.s32.totalorder %s35, %s38
      %p47 = scmp.eq.s32.totalorder %s30, 5
      %p48 = por %p46, %p47
      %p49 = scmp.ne.s32.totalorder %s38, %s39
      %p50 = scmp.eq.s32.totalorder %s30, 0
      %p51 = por %p49, %p50
      %p52 = scmp.ne.s32.totalorder %s38, %s39
      %p53 = scmp.eq.s32.totalorder %s31, 5
      %p54 = por %p52, %p53
      %p56 = scmp.ne.s32.totalorder %s39, %s55
      %p57 = scmp.eq.s32.totalorder %s31, 0
      %p58 = por %p56, %p57
      %s60 = sadd.s32 %s59, 1
      %p63 = scmp.eq.s32.totalorder %s25, 5
      %p64 = scmp.ne.s32.totalorder %s59, %s61
      %p65 = scmp.eq.s32.totalorder %s25, 0
      %p66 = por %p64, %p65
      %p67 = scmp.ne.s32.totalorder %s59, %s61
      %p68 = scmp.eq.s32.totalorder %s30, 5
      %p69 = por %p67, %p68
      %p70 = scmp.ne.s32.totalorder %s61, %s62
      %p71 = scmp.eq.s32.totalorder %s30, 0
      %p72 = por %p70, %p71
      %p73 = scmp.ne.s32.totalorder %s61, %s62
      %p74 = scmp.eq.s32.totalorder %s31, 5
      %p75 = por %p73, %p74
      %p77 = scmp.ne.s32.totalorder %s62, %s76
      %p78 = scmp.eq.s32.totalorder %s31, 0
      %p79 = por %p77, %p78
      %s81 = sadd.s32 %s80, 1
      %p84 = scmp.eq.s32.totalorder %s25, 5
      %p85 = scmp.ne.s32.totalorder %s80, %s82
      %p86 = scmp.eq.s32.totalorder %s25, 0
      %p87 = por %p85, %p86
      %p88 = scmp.ne.s32.totalorder %s80, %s82
      %p89 = scmp.eq.s32.totalorder %s30, 5
      %p90 = por %p88, %p89
      %p91 = scmp.ne.s32.totalorder %s82, %s83
      %p92 = scmp.eq.s32.totalorder %s30, 0
      %p93 = por %p91, %p92
      %p94 = scmp.ne.s32.totalorder %s82, %s83
      %p95 = scmp.eq.s32.totalorder %s31, 5
      %p96 = por %p94, %p95
      %p98 = scmp.ne.s32.totalorder %s83, %s97
      %p99 = scmp.eq.s32.totalorder %s31, 0
      %p100 = por %p98, %p99
      %s102 = sadd.s32 %s101, 1
      %p105 = scmp.eq.s32.totalorder %s25, 5
      %p106 = scmp.ne.s32.totalorder %s101, %s103
      %p107 = scmp.eq.s32.totalorder %s25, 0
      %p108 = por %p106, %p107
      %p109 = scmp.ne.s32.totalorder %s101, %s103
      %p110 = scmp.eq.s32.totalorder %s30, 5
      %p111 = por %p109, %p110
      %p112 = scmp.ne.s32.totalorder %s103, %s104
      %p113 = scmp.eq.s32.totalorder %s30, 0
      %p114 = por %p112, %p113
      %p115 = scmp.ne.s32.totalorder %s103, %s104
      %p116 = scmp.eq.s32.totalorder %s31, 5
      %p117 = por %p115, %p116
      %p119 = scmp.ne.s32.totalorder %s104, %s118
      %p120 = scmp.eq.s32.totalorder %s31, 0
      %p121 = por %p119, %p120
      %s123 = sadd.s32 %s122, 1
      %p126 = scmp.eq.s32.totalorder %s25, 5
      %p127 = scmp.ne.s32.totalorder %s122, %s124
      %p128 = scmp.eq.s32.totalorder %s25, 0
      %p129 = por %p127, %p128
      %p130 = scmp.ne.s32.totalorder %s122, %s124
      %p131 = scmp.eq.s32.totalorder %s30, 5
      %p132 = por %p130, %p131
      %p133 = scmp.ne.s32.totalorder %s124, %s125
      %p134 = scmp.eq.s32.totalorder %s30, 0
      %p135 = por %p133, %p134
      %p136 = scmp.ne.s32.totalorder %s124, %s125
      %p137 = scmp.eq.s32.totalorder %s31, 5
      %p138 = por %p136, %p137
      %p140 = scmp.ne.s32.totalorder %s125, %s139
      %p141 = scmp.eq.s32.totalorder %s31, 0
      %p142 = por %p140, %p141
      %s144 = sadd.s32 %s143, 1
      %p147 = scmp.eq.s32.totalorder %s25, 5
      %p148 = scmp.ne.s32.totalorder %s143, %s145
      %p149 = scmp.eq.s32.totalorder %s25, 0
      %p150 = por %p148, %p149
      %p151 = scmp.ne.s32.totalorder %s143, %s145
      %p152 = scmp.eq.s32.totalorder %s30, 5
      %p153 = por %p151, %p152
      %p154 = scmp.ne.s32.totalorder %s145, %s146
      %p155 = scmp.eq.s32.totalorder %s30, 0
      %p156 = por %p154, %p155
      %p157 = scmp.ne.s32.totalorder %s145, %s146
      %p158 = scmp.eq.s32.totalorder %s31, 5
      %p159 = por %p157, %p158
      %p161 = scmp.ne.s32.totalorder %s146, %s160
      %p162 = scmp.eq.s32.totalorder %s31, 0
      %p163 = por %p161, %p162
      %s165 = sadd.s32 %s164, 1
      %p168 = scmp.eq.s32.totalorder %s25, 5
      %p169 = scmp.ne.s32.totalorder %s164, %s166
      %p170 = scmp.eq.s32.totalorder %s25, 0
      %p171 = por %p169, %p170
      %p172 = scmp.ne.s32.totalorder %s164, %s166
      %p173 = scmp.eq.s32.totalorder %s30, 5
      %p174 = por %p172, %p173
      %p175 = scmp.ne.s32.totalorder %s166, %s167
      %p176 = scmp.eq.s32.totalorder %s30, 0
      %p177 = por %p175, %p176
      %p178 = scmp.ne.s32.totalorder %s166, %s167
      %p179 = scmp.eq.s32.totalorder %s31, 5
      %p180 = por %p178, %p179
      %p182 = scmp.ne.s32.totalorder %s167, %s181
      %p183 = scmp.eq.s32.totalorder %s31, 0
      %p184 = por %p182, %p183
      %s186 = sadd.s32 %s185, 1
      %p189 = scmp.eq.s32.totalorder %s25, 5
      %p190 = scmp.ne.s32.totalorder %s185, %s187
      %p191 = scmp.eq.s32.totalorder %s25, 0
      %p192 = por %p190, %p191
      %p193 = scmp.ne.s32.totalorder %s185, %s187
      %p194 = scmp.eq.s32.totalorder %s30, 5
      %p195 = por %p193, %p194
      %p196 = scmp.ne.s32.totalorder %s187, %s188
      %p197 = scmp.eq.s32.totalorder %s30, 0
      %p198 = por %p196, %p197
      %p199 = scmp.ne.s32.totalorder %s187, %s188
      %p200 = scmp.eq.s32.totalorder %s31, 5
      %p201 = por %p199, %p200
      %p203 = scmp.ne.s32.totalorder %s188, %s202
      %p204 = scmp.eq.s32.totalorder %s31, 0
      %p205 = por %p203, %p204
      %s207 = sadd.s32 %s206, 1
      %p210 = scmp.eq.s32.totalorder %s25, 5
      %p211 = scmp.ne.s32.totalorder %s206, %s208
      %p212 = scmp.eq.s32.totalorder %s25, 0
      %p213 = por %p211, %p212
      %p214 = scmp.ne.s32.totalorder %s206, %s208
      %p215 = scmp.eq.s32.totalorder %s30, 5
      %p216 = por %p214, %p215
      %p217 = scmp.ne.s32.totalorder %s208, %s209
      %p218 = scmp.eq.s32.totalorder %s30, 0
      %p219 = por %p217, %p218
      %p220 = scmp.ne.s32.totalorder %s208, %s209
      %p221 = scmp.eq.s32.totalorder %s31, 5
      %p222 = por %p220, %p221
      %p224 = scmp.ne.s32.totalorder %s209, %s223
      %p225 = scmp.eq.s32.totalorder %s31, 0
      %p226 = por %p224, %p225
      %s228 = sadd.s32 %s227, 1
      %p231 = scmp.eq.s32.totalorder %s25, 5
      %p232 = scmp.ne.s32.totalorder %s227, %s229
      %p233 = scmp.eq.s32.totalorder %s25, 0
      %p234 = por %p232, %p233
      %p235 = scmp.ne.s32.totalorder %s227, %s229
      %p236 = scmp.eq.s32.totalorder %s30, 5
      %p237 = por %p235, %p236
      %p238 = scmp.ne.s32.totalorder %s229, %s230
      %p239 = scmp.eq.s32.totalorder %s30, 0
      %p240 = por %p238, %p239
      %p241 = scmp.ne.s32.totalorder %s229, %s230
      %p242 = scmp.eq.s32.totalorder %s31, 5
      %p243 = por %p241, %p242
      %p245 = scmp.ne.s32.totalorder %s230, %s244
      %p246 = scmp.eq.s32.totalorder %s31, 0
      %p247 = por %p245, %p246
      %s249 = sadd.s32 %s248, 1
      %p252 = scmp.eq.s32.totalorder %s25, 5
      %p253 = scmp.ne.s32.totalorder %s248, %s250
      %p254 = scmp.eq.s32.totalorder %s25, 0
      %p255 = por %p253, %p254
      %p256 = scmp.ne.s32.totalorder %s248, %s250
      %p257 = scmp.eq.s32.totalorder %s30, 5
      %p258 = por %p256, %p257
      %p259 = scmp.ne.s32.totalorder %s250, %s251
      %p260 = scmp.eq.s32.totalorder %s30, 0
      %p261 = por %p259, %p260
      %p262 = scmp.ne.s32.totalorder %s250, %s251
      %p263 = scmp.eq.s32.totalorder %s31, 5
      %p264 = por %p262, %p263
      %p266 = scmp.ne.s32.totalorder %s251, %s265
      %p267 = scmp.eq.s32.totalorder %s31, 0
      %p268 = por %p266, %p267
      %s269 = ssub.s32 %s25, %s32
      %p270 = scmp.eq.s32.totalorder %s269, 0
      %s272 = sadd.s32 %s271, 1
      %s273 = scalar_select %p270, %s271, %s272
      %p276 = pneg %p270
      %p277 = scmp.eq.s32.totalorder %s25, 5
      %p278 = por %p276, %p277
      %p279 = scmp.ne.s32.totalorder %s271, %s274
      %p280 = scmp.eq.s32.totalorder %s25, 0
      %p281 = por %p279, %p280
      %p282 = scmp.ne.s32.totalorder %s271, %s274
      %p283 = scmp.eq.s32.totalorder %s30, 5
      %p284 = por %p282, %p283
      %p285 = scmp.ne.s32.totalorder %s274, %s275
      %p286 = scmp.eq.s32.totalorder %s30, 0
      %p287 = por %p285, %p286
      %p288 = scmp.ne.s32.totalorder %s274, %s275
      %p289 = scmp.eq.s32.totalorder %s31, 5
      %p290 = por %p288, %p289
      %p292 = scmp.ne.s32.totalorder %s275, %s291
      %p293 = scmp.eq.s32.totalorder %s31, 0
      %p294 = por %p292, %p293
      %s295 = ssub.s32 %s25, %s32
      %p296 = scmp.eq.s32.totalorder %s295, 0
      %s298 = sadd.s32 %s297, 1
      %s299 = scalar_select %p296, %s297, %s298
      %p302 = pneg %p296
      %p303 = scmp.eq.s32.totalorder %s25, 5
      %p304 = por %p302, %p303
      %p305 = scmp.ne.s32.totalorder %s297, %s300
      %p306 = scmp.eq.s32.totalorder %s25, 0
      %p307 = por %p305, %p306
      %p308 = scmp.ne.s32.totalorder %s297, %s300
      %p309 = scmp.eq.s32.totalorder %s30, 5
      %p310 = por %p308, %p309
      %p311 = scmp.ne.s32.totalorder %s300, %s301
      %p312 = scmp.eq.s32.totalorder %s30, 0
      %p313 = por %p311, %p312
      %p314 = scmp.ne.s32.totalorder %s300, %s301
      %p315 = scmp.eq.s32.totalorder %s31, 5
      %p316 = por %p314, %p315
      %p318 = scmp.ne.s32.totalorder %s301, %s317
      %p319 = scmp.eq.s32.totalorder %s31, 0
      %p320 = por %p318, %p319
      %p321 = scmp.le.s32.totalorder 1, %s25
      %p322 = scmp.lt.s32.totalorder %s25, 7
      %p323 = pnand %p321, %p322
      %p324 = pneg %p323
      // Predicated region
      $region9: #{intra_model_reasoning_cell.1} parent=5 // pred_check
        _
      $region10: #{intra_model_reasoning_cell.1} parent=5 // pred_check_branch
        %326 = sbr.rel (%p323) target = $region12
      $region11: #{intra_model_reasoning_cell.1} parent=5 // pred_region
        %s327 = ssub.s32 %s25, 1
        // Predicated region
        $region13: #{intra_model_reasoning_cell.1} parent=11 // pred_check
          %p328 = pneg %p72
        $region14: #{intra_model_reasoning_cell.1} parent=11 // pred_check_branch
          %330 = sbr.rel (%p328) target = $region16
        $region15: #{intra_model_reasoning_cell.1} parent=11 // pred_region
          _
        $region16: #{intra_model_reasoning_cell.1} parent=11 // pred_fallthru
          _
        // Predicated region
        $region17: #{intra_model_reasoning_cell.1} parent=11 // pred_check
          %p331 = pneg %p93
        $region18: #{intra_model_reasoning_cell.1} parent=11 // pred_check_branch
          %333 = sbr.rel (%p331) target = $region20
        $region19: #{intra_model_reasoning_cell.1} parent=11 // pred_region
          _
        $region20: #{intra_model_reasoning_cell.1} parent=11 // pred_fallthru
          _
        // Predicated region
        $region21: #{intra_model_reasoning_cell.1} parent=11 // pred_check
          %p334 = pneg %p114
        $region22: #{intra_model_reasoning_cell.1} parent=11 // pred_check_branch
          %336 = sbr.rel (%p334) target = $region24
        $region23: #{intra_model_reasoning_cell.1} parent=11 // pred_region
          _
        $region24: #{intra_model_reasoning_cell.1} parent=11 // pred_fallthru
          _
        // Predicated region
        $region25: #{intra_model_reasoning_cell.1} parent=11 // pred_check
          %p337 = pneg %p135
        $region26: #{intra_model_reasoning_cell.1} parent=11 // pred_check_branch
          %339 = sbr.rel (%p337) target = $region28
        $region27: #{intra_model_reasoning_cell.1} parent=11 // pred_region
          _
        $region28: #{intra_model_reasoning_cell.1} parent=11 // pred_fallthru
          _
        // Predicated region
        $region29: #{intra_model_reasoning_cell.1} parent=11 // pred_check
          %p340 = pneg %p156
        $region30: #{intra_model_reasoning_cell.1} parent=11 // pred_check_branch
          %342 = sbr.rel (%p340) target = $region32
        $region31: #{intra_model_reasoning_cell.1} parent=11 // pred_region
          _
        $region32: #{intra_model_reasoning_cell.1} parent=11 // pred_fallthru
          _
        // Predicated region
        $region33: #{intra_model_reasoning_cell.1} parent=11 // pred_check
          %p343 = pneg %p177
        $region34: #{intra_model_reasoning_cell.1} parent=11 // pred_check_branch
          %345 = sbr.rel (%p343) target = $region36
        $region35: #{intra_model_reasoning_cell.1} parent=11 // pred_region
          %s347 = ssub.s32 16, 16
          %348 = vsyncadd [#allocation3], %s347
          %s350 = sshll.u32 [#allocation2], 4
          %s351 = int_to_ptr.vmem [resolvable:$true] %s350
          %353 = dma.hbm_to_vmem [thread:$0]  %s6, 16, %s351, [#allocation3]
        $region36: #{intra_model_reasoning_cell.1} parent=11 // pred_fallthru
          _
        // Predicated region
        $region37: #{intra_model_reasoning_cell.1} parent=11 // pred_check
          %p354 = pneg %p198
        $region38: #{intra_model_reasoning_cell.1} parent=11 // pred_check_branch
          %356 = sbr.rel (%p354) target = $region40
        $region39: #{intra_model_reasoning_cell.1} parent=11 // pred_region
          %s358 = ssub.s32 512, 512
          %359 = vsyncadd [#allocation6], %s358
          %s360 = sshll.u32 [#allocation5], 4
          %s361 = int_to_ptr.vmem [resolvable:$true] %s360
          %366 = dma.hbm_to_vmem [thread:$0]  %s7, 512, %s361, [#allocation6], 128, 128, 8
        $region40: #{intra_model_reasoning_cell.1} parent=11 // pred_fallthru
          _
        // Predicated region
        $region41: #{intra_model_reasoning_cell.1} parent=11 // pred_check
          %p367 = pneg %p219
        $region42: #{intra_model_reasoning_cell.1} parent=11 // pred_check_branch
          %369 = sbr.rel (%p367) target = $region44
        $region43: #{intra_model_reasoning_cell.1} parent=11 // pred_region
          %s371 = ssub.s32 16, 16
          %372 = vsyncadd [#allocation6], %s371
          %s374 = sshll.u32 [#allocation7], 4
          %s375 = int_to_ptr.vmem [resolvable:$true] %s374
          %377 = dma.hbm_to_vmem [thread:$0]  %s8, 16, %s375, [#allocation6]
        $region44: #{intra_model_reasoning_cell.1} parent=11 // pred_fallthru
          _
        // Predicated region
        $region45: #{intra_model_reasoning_cell.1} parent=11 // pred_check
          %p378 = pneg %p240
        $region46: #{intra_model_reasoning_cell.1} parent=11 // pred_check_branch
          %380 = sbr.rel (%p378) target = $region48
        $region47: #{intra_model_reasoning_cell.1} parent=11 // pred_region
          %s382 = ssub.s32 16, 16
          %383 = vsyncadd [#allocation9], %s382
          %s385 = sshll.u32 [#allocation8], 4
          %s386 = int_to_ptr.vmem [resolvable:$true] %s385
          %388 = dma.hbm_to_vmem [thread:$0]  %s9, 16, %s386, [#allocation9]
        $region48: #{intra_model_reasoning_cell.1} parent=11 // pred_fallthru
          _
        // Predicated region
        $region49: #{intra_model_reasoning_cell.1} parent=11 // pred_check
          %p389 = pneg %p261
        $region50: #{intra_model_reasoning_cell.1} parent=11 // pred_check_branch
          %391 = sbr.rel (%p389) target = $region52
        $region51: #{intra_model_reasoning_cell.1} parent=11 // pred_region
          %s393 = ssub.s32 16, 16
          %394 = vsyncadd [#allocation9], %s393
          %s396 = sshll.u32 [#allocation10], 4
          %s397 = int_to_ptr.vmem [resolvable:$true] %s396
          %399 = dma.hbm_to_vmem [thread:$0]  %s10, 16, %s397, [#allocation9]
        $region52: #{intra_model_reasoning_cell.1} parent=11 // pred_fallthru
          _
      $region12: #{intra_model_reasoning_cell.1} parent=5 // pred_fallthru
        _
      %p400 = scmp.lt.s32.totalorder %s25, 6
      // Predicated region
      $region53: #{intra_model_reasoning_cell.1} parent=5 // pred_check
        %p401 = pneg %p400
      $region54: #{intra_model_reasoning_cell.1} parent=5 // pred_check_branch
        %403 = sbr.rel (%p401) target = $region56
      $region55: #{intra_model_reasoning_cell.1} parent=5 // pred_region
        // Predicated region
        $region57: #{intra_model_reasoning_cell.1} parent=55 // pred_check
          %p404 = pneg %p45
        $region58: #{intra_model_reasoning_cell.1} parent=55 // pred_check_branch
          %406 = sbr.rel (%p404) target = $region60
        $region59: #{intra_model_reasoning_cell.1} parent=55 // pred_region
          %p407 = scmp.lt.s32.totalorder %s25, 5
          %s408 = scalar_select %p407, %s25, 5
          %s409 = smul.addr %s408, 8
          %s410 = scalar_lea.vmem %s0, %s409
        $region60: #{intra_model_reasoning_cell.1} parent=55 // pred_fallthru
          _
      $region56: #{intra_model_reasoning_cell.1} parent=5 // pred_fallthru
        _
      %p411 = scmp.le.s32.totalorder 1, %s25
      %p412 = scmp.lt.s32.totalorder %s25, 7
      %p413 = pnand %p411, %p412
      %p414 = pneg %p413
      // Predicated region
      $region61: #{intra_model_reasoning_cell.1} parent=5 // pred_check
        _
      $region62: #{intra_model_reasoning_cell.1} parent=5 // pred_check_branch
        %416 = sbr.rel (%p413) target = $region64
      $region63: #{intra_model_reasoning_cell.1} parent=5 // pred_region
        %s417 = ssub.s32 %s25, 1
        // Predicated region
        $region65: #{intra_model_reasoning_cell.1} parent=63 // pred_check
          %p418 = pneg %p177
        $region66: #{intra_model_reasoning_cell.1} parent=63 // pred_check_branch
          %420 = sbr.rel (%p418) target = $region68
        $region67: #{intra_model_reasoning_cell.1} parent=63 // pred_region
          %421 = dma.done [#allocation3], 16
        $region68: #{intra_model_reasoning_cell.1} parent=63 // pred_fallthru
          _
        // Predicated region
        $region69: #{intra_model_reasoning_cell.1} parent=63 // pred_check
          %p422 = pneg %p198
        $region70: #{intra_model_reasoning_cell.1} parent=63 // pred_check_branch
          %424 = sbr.rel (%p422) target = $region72
        $region71: #{intra_model_reasoning_cell.1} parent=63 // pred_region
          %425 = dma.done [#allocation6], 512
        $region72: #{intra_model_reasoning_cell.1} parent=63 // pred_fallthru
          _
        // Predicated region
        $region73: #{intra_model_reasoning_cell.1} parent=63 // pred_check
          %p426 = pneg %p219
        $region74: #{intra_model_reasoning_cell.1} parent=63 // pred_check_branch
          %428 = sbr.rel (%p426) target = $region76
        $region75: #{intra_model_reasoning_cell.1} parent=63 // pred_region
          %429 = dma.done [#allocation6], 16
        $region76: #{intra_model_reasoning_cell.1} parent=63 // pred_fallthru
          _
        // Predicated region
        $region77: #{intra_model_reasoning_cell.1} parent=63 // pred_check
          %p430 = pneg %p240
        $region78: #{intra_model_reasoning_cell.1} parent=63 // pred_check_branch
          %432 = sbr.rel (%p430) target = $region80
        $region79: #{intra_model_reasoning_cell.1} parent=63 // pred_region
          %433 = dma.done [#allocation9], 16
        $region80: #{intra_model_reasoning_cell.1} parent=63 // pred_fallthru
          _
        // Predicated region
        $region81: #{intra_model_reasoning_cell.1} parent=63 // pred_check
          %p434 = pneg %p261
        $region82: #{intra_model_reasoning_cell.1} parent=63 // pred_check_branch
          %436 = sbr.rel (%p434) target = $region84
        $region83: #{intra_model_reasoning_cell.1} parent=63 // pred_region
          %437 = dma.done [#allocation9], 16
        $region84: #{intra_model_reasoning_cell.1} parent=63 // pred_fallthru
          _
        %p438 = scmp.lt.s32.totalorder %s30, 5
        %s439 = scalar_select %p438, %s30, 5
        %s440 = smul.addr %s439, 8
        %s441 = scalar_lea.vmem %s0, %s440
        %p442 = pneg %p51
        %p443 = pneg %p48
        %p444 = pneg %p72
        %p445 = pneg %p69
        %p446 = pneg %p93
        %p447 = pneg %p90
        %p448 = pneg %p114
        %p449 = pneg %p111
        %p450 = pneg %p135
        %p451 = pneg %p132
        %p452 = pneg %p156
        %p453 = pneg %p153
        %p454 = pneg %p177
        %p455 = pneg %p174
        %p456 = pneg %p198
        %p457 = pneg %p195
        %p458 = pneg %p219
        %p459 = pneg %p216
        %p460 = pneg %p240
        %p461 = pneg %p237
        %p462 = pneg %p261
        %p463 = pneg %p258
        %p464 = pneg %p287
        %p465 = pneg %p284
        %s466 = sand.u32 %s274, 1
        %s467 = scalar_lea.sflag [#allocation4], %s466
        %s468 = sand.u32 %s274, 1
        %s469 = smul.addr %s468, 8
        %s470 = scalar_lea.vmem [#allocation11], %s469
        %p471 = pneg %p313
        %p472 = pneg %p310
        %p473 = scmp.lt.s32.totalorder %s30, 5
        %s474 = scalar_select %p473, %s30, 5
        %s475 = scalar_lea.vmem %s12, %s474
        %p476 = scmp.lt.s32.totalorder %s30, 5
        %s477 = scalar_select %p476, %s30, 5
        %s478 = smul.addr %s477, 8
        %s479 = scalar_lea.vmem %s0, %s478
        %p480 = scmp.lt.s32.totalorder %s30, 5
        %s481 = scalar_select %p480, %s30, 5
        %s482 = scalar_lea.vmem %s12, %s481
        %v483 = vld [vmem:[%s479] sm:$0xff]
        %vm484 = vcmask 261120
        %v485 = vsel %vm484, %v483, 0.0
        %v486 = vrot.slane %v485, 4
        %v487 = vadd.f32 %v485, %v486
        %v488 = vrot.slane %v487, 2
        %v489 = vadd.f32 %v487, %v488
        %v490 = vrot.slane %v489, 1
        %v491 = vadd.f32 %v489, %v490
        %v492 = vrcp.pop 8.0
        %v493 = vmul.f32 %v491, %v492
        %v494 = vld [vmem:[%s1] sm:$0xff]
        %v495 = vld [vmem:[%s1 + $0x8] sm:$0xff]
        %v496 = vld [vmem:[%s1 + $0x10] sm:$0xff]
        %v497 = vld [vmem:[%s1 + $0x18] sm:$0xff]
        %v498 = vld [vmem:[%s2] sm:$0x1]
        %v500 = vsel %vm484, %v493, 0
        %502 = vmatprep.subr.mxu0 0.0
        %503 = vmatpush1.msra.mxu0 %v494
        %504 = vmatprep.subr.mxu0 0.0
        %505 = vmatpush1.msra.mxu0 %v495
        %506 = vmatprep.subr.mxu0 0.0
        %507 = vmatpush1.msra.mxu0 %v496
        %508 = vmatprep.subr.mxu0 0.0
        %509 = vmatpush1.msra.mxu0 %v497
        %510 = vmatprep.subr.mxu0 0.0
        %511 = vmatpush1.msra.mxu0 0.0
        %512 = vmatprep.subr.mxu0 0.0
        %513 = vmatpush1.msra.mxu0 0.0
        %514 = vmatprep.subr.mxu0 0.0
        %515 = vmatpush1.msra.mxu0 0.0
        %516 = vmatprep.subr.mxu0 0.0
        %517 = vmatpush1.msra.mxu0 0.0
        %518 = vmatprep.subr.mxu0 0.0
        %519 = vmatpush1.msra.mxu0 0.0
        %520 = vmatprep.subr.mxu0 0.0
        %521 = vmatpush1.msra.mxu0 0.0
        %522 = vmatprep.subr.mxu0 0.0
        %523 = vmatpush1.msra.mxu0 0.0
        %524 = vmatprep.subr.mxu0 0.0
        %525 = vmatpush1.msra.mxu0 0.0
        %526 = vmatprep.subr.mxu0 0.0
        %527 = vmatpush1.msra.mxu0 0.0
        %528 = vmatprep.subr.mxu0 0.0
        %529 = vmatpush1.msra.mxu0 0.0
        %530 = vmatprep.subr.mxu0 0.0
        %531 = vmatpush1.msra.mxu0 0.0
        %532 = vmatprep.subr.mxu0 0.0
        %533 = vmatpush1.msra.mxu0 0.0
        %534 = vmatprep.subr.mxu0 0.0
        %535 = vmatpush1.msra.mxu0 0.0
        %536 = vmatprep.subr.mxu0 0.0
        %537 = vmatpush1.msra.mxu0 0.0
        %538 = vmatprep.subr.mxu0 0.0
        %539 = vmatpush1.msra.mxu0 0.0
        %540 = vmatprep.subr.mxu0 0.0
        %541 = vmatpush1.msra.mxu0 0.0
        %542 = vmatprep.subr.mxu0 0.0
        %543 = vmatpush1.msra.mxu0 0.0
        %544 = vmatprep.subr.mxu0 0.0
        %545 = vmatpush1.msra.mxu0 0.0
        %546 = vmatprep.subr.mxu0 0.0
        %547 = vmatpush1.msra.mxu0 0.0
        %548 = vmatprep.subr.mxu0 0.0
        %549 = vmatpush1.msra.mxu0 0.0
        %550 = vmatprep.subr.mxu0 0.0
        %551 = vmatpush1.msra.mxu0 0.0
        %552 = vmatprep.subr.mxu0 0.0
        %553 = vmatpush1.msra.mxu0 0.0
        %554 = vmatprep.subr.mxu0 0.0
        %555 = vmatpush1.msra.mxu0 0.0
        %556 = vmatprep.subr.mxu0 0.0
        %557 = vmatpush1.msra.mxu0 0.0
        %558 = vmatprep.subr.mxu0 0.0
        %559 = vmatpush1.msra.mxu0 0.0
        %560 = vmatprep.subr.mxu0 0.0
        %561 = vmatpush1.msra.mxu0 0.0
        %562 = vmatprep.subr.mxu0 0.0
        %563 = vmatpush1.msra.mxu0 0.0
        %564 = vmatprep.subr.mxu0 0.0
        %565 = vmatpush1.msra.mxu0 0.0
        %566 = vmatprep.mubr.f32.mxu0 0.0
        %567 = vmatmul.mubr.f32.gmra.mrb[0].mxu0 %v500
        %v568 = vpop.f32.mrb[0].mxu0
        %v569 = vadd.f32 %v498, %v568
        %v570 = vpop.f32.mrb[0].mxu0
        %571 = vdwg.mxu0
        %v572 = vmax.f32 %v569, 0.0
        %v573 = vld [vmem:[%s3] sm:$0xff]
        %v574 = vld [vmem:[%s3 + $0x8] sm:$0xff]
        %v575 = vld [vmem:[%s4] sm:$0x1]
        %vm576 = vcmask 130048
        %v578 = vsel %vm576, %v572, 0
        %580 = vmatprep.subr.mxu0 0.0
        %581 = vmatpush1.msra.mxu0 %v573
        %582 = vmatprep.subr.mxu0 0.0
        %583 = vmatpush1.msra.mxu0 %v574
        %584 = vmatprep.subr.mxu0 0.0
        %585 = vmatpush1.msra.mxu0 0.0
        %586 = vmatprep.subr.mxu0 0.0
        %587 = vmatpush1.msra.mxu0 0.0
        %588 = vmatprep.subr.mxu0 0.0
        %589 = vmatpush1.msra.mxu0 0.0
        %590 = vmatprep.subr.mxu0 0.0
        %591 = vmatpush1.msra.mxu0 0.0
        %592 = vmatprep.subr.mxu0 0.0
        %593 = vmatpush1.msra.mxu0 0.0
        %594 = vmatprep.subr.mxu0 0.0
        %595 = vmatpush1.msra.mxu0 0.0
        %596 = vmatprep.subr.mxu0 0.0
        %597 = vmatpush1.msra.mxu0 0.0
        %598 = vmatprep.subr.mxu0 0.0
        %599 = vmatpush1.msra.mxu0 0.0
        %600 = vmatprep.subr.mxu0 0.0
        %601 = vmatpush1.msra.mxu0 0.0
        %602 = vmatprep.subr.mxu0 0.0
        %603 = vmatpush1.msra.mxu0 0.0
        %604 = vmatprep.subr.mxu0 0.0
        %605 = vmatpush1.msra.mxu0 0.0
        %606 = vmatprep.subr.mxu0 0.0
        %607 = vmatpush1.msra.mxu0 0.0
        %608 = vmatprep.subr.mxu0 0.0
        %609 = vmatpush1.msra.mxu0 0.0
        %610 = vmatprep.subr.mxu0 0.0
        %611 = vmatpush1.msra.mxu0 0.0
        %612 = vmatprep.subr.mxu0 0.0
        %613 = vmatpush1.msra.mxu0 0.0
        %614 = vmatprep.subr.mxu0 0.0
        %615 = vmatpush1.msra.mxu0 0.0
        %616 = vmatprep.subr.mxu0 0.0
        %617 = vmatpush1.msra.mxu0 0.0
        %618 = vmatprep.subr.mxu0 0.0
        %619 = vmatpush1.msra.mxu0 0.0
        %620 = vmatprep.subr.mxu0 0.0
        %621 = vmatpush1.msra.mxu0 0.0
        %622 = vmatprep.subr.mxu0 0.0
        %623 = vmatpush1.msra.mxu0 0.0
        %624 = vmatprep.subr.mxu0 0.0
        %625 = vmatpush1.msra.mxu0 0.0
        %626 = vmatprep.subr.mxu0 0.0
        %627 = vmatpush1.msra.mxu0 0.0
        %628 = vmatprep.subr.mxu0 0.0
        %629 = vmatpush1.msra.mxu0 0.0
        %630 = vmatprep.subr.mxu0 0.0
        %631 = vmatpush1.msra.mxu0 0.0
        %632 = vmatprep.subr.mxu0 0.0
        %633 = vmatpush1.msra.mxu0 0.0
        %634 = vmatprep.subr.mxu0 0.0
        %635 = vmatpush1.msra.mxu0 0.0
        %636 = vmatprep.subr.mxu0 0.0
        %637 = vmatpush1.msra.mxu0 0.0
        %638 = vmatprep.subr.mxu0 0.0
        %639 = vmatpush1.msra.mxu0 0.0
        %640 = vmatprep.subr.mxu0 0.0
        %641 = vmatpush1.msra.mxu0 0.0
        %642 = vmatprep.subr.mxu0 0.0
        %643 = vmatpush1.msra.mxu0 0.0
        %644 = vmatprep.mubr.f32.mxu0 0.0
        %645 = vmatmul.mubr.f32.gmra.mrb[0].mxu0 %v578
        %v646 = vpop.f32.mrb[0].mxu0
        %v647 = vadd.f32 %v575, %v646
        %v648 = vpop.f32.mrb[0].mxu0
        %649 = vdwg.mxu0
        %v650 = vtanh.pop %v647
        %v651 = vmax.f32 %v650, 0.0
        %vm652 = vcmask 24576
        %653 = vst.msk [vmem:[%s482] sm:$0x1] %vm652, %v651
        %v654 = vld [vmem:[%s5] sm:$0xff]
        %v655 = vld [vmem:[%s5 + $0x8] sm:$0xff]
        %v656 = vld [vmem:[%s5 + $0x10] sm:$0xff]
        %v657 = vld [vmem:[%s5 + $0x18] sm:$0xff]
        %v658 = vld [vmem:[#allocation2] sm:$0x1]
        %v660 = vlaneseq
        %v661 = vshrl.u32 %v660, 7
        %v662 = vsub.s32 0, %v661
        %v663 = vrot.slane %v658, %v662
        %v666 = vsel %vm484, %v483, 0
        %668 = vmatprep.subr.mxu0 0.0
        %669 = vmatpush1.msra.mxu0 %v654
        %670 = vmatprep.subr.mxu0 0.0
        %671 = vmatpush1.msra.mxu0 %v655
        %672 = vmatprep.subr.mxu0 0.0
        %673 = vmatpush1.msra.mxu0 %v656
        %674 = vmatprep.subr.mxu0 0.0
        %675 = vmatpush1.msra.mxu0 %v657
        %676 = vmatprep.subr.mxu0 0.0
        %677 = vmatpush1.msra.mxu0 0.0
        %678 = vmatprep.subr.mxu0 0.0
        %679 = vmatpush1.msra.mxu0 0.0
        %680 = vmatprep.subr.mxu0 0.0
        %681 = vmatpush1.msra.mxu0 0.0
        %682 = vmatprep.subr.mxu0 0.0
        %683 = vmatpush1.msra.mxu0 0.0
        %684 = vmatprep.subr.mxu0 0.0
        %685 = vmatpush1.msra.mxu0 0.0
        %686 = vmatprep.subr.mxu0 0.0
        %687 = vmatpush1.msra.mxu0 0.0
        %688 = vmatprep.subr.mxu0 0.0
        %689 = vmatpush1.msra.mxu0 0.0
        %690 = vmatprep.subr.mxu0 0.0
        %691 = vmatpush1.msra.mxu0 0.0
        %692 = vmatprep.subr.mxu0 0.0
        %693 = vmatpush1.msra.mxu0 0.0
        %694 = vmatprep.subr.mxu0 0.0
        %695 = vmatpush1.msra.mxu0 0.0
        %696 = vmatprep.subr.mxu0 0.0
        %697 = vmatpush1.msra.mxu0 0.0
        %698 = vmatprep.subr.mxu0 0.0
        %699 = vmatpush1.msra.mxu0 0.0
        %700 = vmatprep.subr.mxu0 0.0
        %701 = vmatpush1.msra.mxu0 0.0
        %702 = vmatprep.subr.mxu0 0.0
        %703 = vmatpush1.msra.mxu0 0.0
        %704 = vmatprep.subr.mxu0 0.0
        %705 = vmatpush1.msra.mxu0 0.0
        %706 = vmatprep.subr.mxu0 0.0
        %707 = vmatpush1.msra.mxu0 0.0
        %708 = vmatprep.subr.mxu0 0.0
        %709 = vmatpush1.msra.mxu0 0.0
        %710 = vmatprep.subr.mxu0 0.0
        %711 = vmatpush1.msra.mxu0 0.0
        %712 = vmatprep.subr.mxu0 0.0
        %713 = vmatpush1.msra.mxu0 0.0
        %714 = vmatprep.subr.mxu0 0.0
        %715 = vmatpush1.msra.mxu0 0.0
        %716 = vmatprep.subr.mxu0 0.0
        %717 = vmatpush1.msra.mxu0 0.0
        %718 = vmatprep.subr.mxu0 0.0
        %719 = vmatpush1.msra.mxu0 0.0
        %720 = vmatprep.subr.mxu0 0.0
        %721 = vmatpush1.msra.mxu0 0.0
        %722 = vmatprep.subr.mxu0 0.0
        %723 = vmatpush1.msra.mxu0 0.0
        %724 = vmatprep.subr.mxu0 0.0
        %725 = vmatpush1.msra.mxu0 0.0
        %726 = vmatprep.subr.mxu0 0.0
        %727 = vmatpush1.msra.mxu0 0.0
        %728 = vmatprep.subr.mxu0 0.0
        %729 = vmatpush1.msra.mxu0 0.0
        %730 = vmatprep.subr.mxu0 0.0
        %731 = vmatpush1.msra.mxu0 0.0
        %732 = vmatprep.mubr.f32.mxu0 0.0
        %733 = vmatmul.mubr.f32.gmra.mrb[0].mxu0 %v666
        %v734 = vpop.f32.mrb[0].mxu0
        %v735 = vadd.f32 %v663, %v734
        %v736 = vpop.f32.mrb[0].mxu0
        %737 = vdwg.mxu0
        %v738 = vmul.f32 %v735, 0.35355338
        %740 = vrot.lane.b32.xlu0 %v735, 96
        %v741 = vpop.permute.xlu0 %740
        %vm742 = vcmask 64512
        %v744 = vsel %vm742, %v738, 0
        %v746 = vsel %vm742, %v741, 0
        %748 = vmatprep.subr.mxu0 0.0
        %749 = vmatpush1.xpose.msra.mxu0 %v746
        %750 = vmatprep.subr.mxu0 0.0
        %751 = vmatpush1.xpose.msra.mxu0 0.0
        %752 = vmatprep.subr.mxu0 0.0
        %753 = vmatpush1.xpose.msra.mxu0 0.0
        %754 = vmatprep.subr.mxu0 0.0
        %755 = vmatpush1.xpose.msra.mxu0 0.0
        %756 = vmatprep.subr.mxu0 0.0
        %757 = vmatpush1.xpose.msra.mxu0 0.0
        %758 = vmatprep.subr.mxu0 0.0
        %759 = vmatpush1.xpose.msra.mxu0 0.0
        %760 = vmatprep.subr.mxu0 0.0
        %761 = vmatpush1.xpose.msra.mxu0 0.0
        %762 = vmatprep.subr.mxu0 0.0
        %763 = vmatpush1.xpose.msra.mxu0 0.0
        %764 = vmatprep.subr.mxu0 0.0
        %765 = vmatpush1.xpose.msra.mxu0 0.0
        %766 = vmatprep.subr.mxu0 0.0
        %767 = vmatpush1.xpose.msra.mxu0 0.0
        %768 = vmatprep.subr.mxu0 0.0
        %769 = vmatpush1.xpose.msra.mxu0 0.0
        %770 = vmatprep.subr.mxu0 0.0
        %771 = vmatpush1.xpose.msra.mxu0 0.0
        %772 = vmatprep.subr.mxu0 0.0
        %773 = vmatpush1.xpose.msra.mxu0 0.0
        %774 = vmatprep.subr.mxu0 0.0
        %775 = vmatpush1.xpose.msra.mxu0 0.0
        %776 = vmatprep.subr.mxu0 0.0
        %777 = vmatpush1.xpose.msra.mxu0 0.0
        %778 = vmatprep.subr.mxu0 0.0
        %779 = vmatpush1.xpose.msra.mxu0 0.0
        %780 = vmatprep.subr.mxu0 0.0
        %781 = vmatpush1.xpose.msra.mxu0 0.0
        %782 = vmatprep.subr.mxu0 0.0
        %783 = vmatpush1.xpose.msra.mxu0 0.0
        %784 = vmatprep.subr.mxu0 0.0
        %785 = vmatpush1.xpose.msra.mxu0 0.0
        %786 = vmatprep.subr.mxu0 0.0
        %787 = vmatpush1.xpose.msra.mxu0 0.0
        %788 = vmatprep.subr.mxu0 0.0
        %789 = vmatpush1.xpose.msra.mxu0 0.0
        %790 = vmatprep.subr.mxu0 0.0
        %791 = vmatpush1.xpose.msra.mxu0 0.0
        %792 = vmatprep.subr.mxu0 0.0
        %793 = vmatpush1.xpose.msra.mxu0 0.0
        %794 = vmatprep.subr.mxu0 0.0
        %795 = vmatpush1.xpose.msra.mxu0 0.0
        %796 = vmatprep.subr.mxu0 0.0
        %797 = vmatpush1.xpose.msra.mxu0 0.0
        %798 = vmatprep.subr.mxu0 0.0
        %799 = vmatpush1.xpose.msra.mxu0 0.0
        %800 = vmatprep.subr.mxu0 0.0
        %801 = vmatpush1.xpose.msra.mxu0 0.0
        %802 = vmatprep.subr.mxu0 0.0
        %803 = vmatpush1.xpose.msra.mxu0 0.0
        %804 = vmatprep.subr.mxu0 0.0
        %805 = vmatpush1.xpose.msra.mxu0 0.0
        %806 = vmatprep.subr.mxu0 0.0
        %807 = vmatpush1.xpose.msra.mxu0 0.0
        %808 = vmatprep.subr.mxu0 0.0
        %809 = vmatpush1.xpose.msra.mxu0 0.0
        %810 = vmatprep.subr.mxu0 0.0
        %811 = vmatpush1.xpose.msra.mxu0 0.0
        %812 = vmatprep.mubr.f32.mxu0 0.0
        %813 = vmatmul.mubr.f32.gmra.mrb[0].mxu0 %v744
        %v814 = vpop.f32.mrb[0].mxu0
        %v815 = vadd.f32 0.0, %v814
        %v816 = vpop.f32.mrb[0].mxu0
        %817 = vdwg.mxu0
        %v818 = vsel %vm742, %v815, -inf
        %819 = vmax.xlane.f32.xlu0 %v818
        %v820 = vpop.xlane.xlu0 %819
        %v821 = vsub.f32 %v815, %v820
        %v822 = vmul.f32 %v821, 1.442695
        %v823 = vpow.pop %v822
        %v824 = vsel %vm742, %v823, 0.0
        %825 = vadd.xlane.f32.xlu0 %v824
        %v826 = vpop.xlane.xlu0 %825
        %v827 = vrcp.pop %v826
        %v828 = vmul.f32 %v823, %v827
        %829 = vrot.lane.b32.xlu0 %v735, 64
        %v830 = vpop.permute.xlu0 %829
        %v833 = vsel %vm742, %v828, 0
        %835 = vmatprep.subr.mxu0 0.0
        %836 = vmatpush1.msra.mxu0 %v830
        %837 = vmatprep.subr.mxu0 0.0
        %838 = vmatpush1.msra.mxu0 0.0
        %839 = vmatprep.subr.mxu0 0.0
        %840 = vmatpush1.msra.mxu0 0.0
        %841 = vmatprep.subr.mxu0 0.0
        %842 = vmatpush1.msra.mxu0 0.0
        %843 = vmatprep.subr.mxu0 0.0
        %844 = vmatpush1.msra.mxu0 0.0
        %845 = vmatprep.subr.mxu0 0.0
        %846 = vmatpush1.msra.mxu0 0.0
        %847 = vmatprep.subr.mxu0 0.0
        %848 = vmatpush1.msra.mxu0 0.0
        %849 = vmatprep.subr.mxu0 0.0
        %850 = vmatpush1.msra.mxu0 0.0
        %851 = vmatprep.subr.mxu0 0.0
        %852 = vmatpush1.msra.mxu0 0.0
        %853 = vmatprep.subr.mxu0 0.0
        %854 = vmatpush1.msra.mxu0 0.0
        %855 = vmatprep.subr.mxu0 0.0
        %856 = vmatpush1.msra.mxu0 0.0
        %857 = vmatprep.subr.mxu0 0.0
        %858 = vmatpush1.msra.mxu0 0.0
        %859 = vmatprep.subr.mxu0 0.0
        %860 = vmatpush1.msra.mxu0 0.0
        %861 = vmatprep.subr.mxu0 0.0
        %862 = vmatpush1.msra.mxu0 0.0
        %863 = vmatprep.subr.mxu0 0.0
        %864 = vmatpush1.msra.mxu0 0.0
        %865 = vmatprep.subr.mxu0 0.0
        %866 = vmatpush1.msra.mxu0 0.0
        %867 = vmatprep.subr.mxu0 0.0
        %868 = vmatpush1.msra.mxu0 0.0
        %869 = vmatprep.subr.mxu0 0.0
        %870 = vmatpush1.msra.mxu0 0.0
        %871 = vmatprep.subr.mxu0 0.0
        %872 = vmatpush1.msra.mxu0 0.0
        %873 = vmatprep.subr.mxu0 0.0
        %874 = vmatpush1.msra.mxu0 0.0
        %875 = vmatprep.subr.mxu0 0.0
        %876 = vmatpush1.msra.mxu0 0.0
        %877 = vmatprep.subr.mxu0 0.0
        %878 = vmatpush1.msra.mxu0 0.0
        %879 = vmatprep.subr.mxu0 0.0
        %880 = vmatpush1.msra.mxu0 0.0
        %881 = vmatprep.subr.mxu0 0.0
        %882 = vmatpush1.msra.mxu0 0.0
        %883 = vmatprep.subr.mxu0 0.0
        %884 = vmatpush1.msra.mxu0 0.0
        %885 = vmatprep.subr.mxu0 0.0
        %886 = vmatpush1.msra.mxu0 0.0
        %887 = vmatprep.subr.mxu0 0.0
        %888 = vmatpush1.msra.mxu0 0.0
        %889 = vmatprep.subr.mxu0 0.0
        %890 = vmatpush1.msra.mxu0 0.0
        %891 = vmatprep.subr.mxu0 0.0
        %892 = vmatpush1.msra.mxu0 0.0
        %893 = vmatprep.subr.mxu0 0.0
        %894 = vmatpush1.msra.mxu0 0.0
        %895 = vmatprep.subr.mxu0 0.0
        %896 = vmatpush1.msra.mxu0 0.0
        %897 = vmatprep.subr.mxu0 0.0
        %898 = vmatpush1.msra.mxu0 0.0
        %899 = vmatprep.mubr.f32.mxu0 0.0
        %900 = vmatmul.mubr.f32.gmra.mrb[0].mxu0 %v833
        %v901 = vpop.f32.mrb[0].mxu0
        %v902 = vadd.f32 0.0, %v901
        %v903 = vpop.f32.mrb[0].mxu0
        %904 = vdwg.mxu0
        %905 = vrot.lane.b32.xlu0 %v738, 120
        %v906 = vpop.permute.xlu0 %905
        %907 = vrot.lane.b32.xlu0 %v735, 88
        %v908 = vpop.permute.xlu0 %907
        %v909 = vsel %vm742, %v906, 0
        %v911 = vsel %vm742, %v908, 0
        %913 = vmatprep.subr.mxu0 0.0
        %914 = vmatpush1.xpose.msra.mxu0 %v911
        %915 = vmatprep.subr.mxu0 0.0
        %916 = vmatpush1.xpose.msra.mxu0 0.0
        %917 = vmatprep.subr.mxu0 0.0
        %918 = vmatpush1.xpose.msra.mxu0 0.0
        %919 = vmatprep.subr.mxu0 0.0
        %920 = vmatpush1.xpose.msra.mxu0 0.0
        %921 = vmatprep.subr.mxu0 0.0
        %922 = vmatpush1.xpose.msra.mxu0 0.0
        %923 = vmatprep.subr.mxu0 0.0
        %924 = vmatpush1.xpose.msra.mxu0 0.0
        %925 = vmatprep.subr.mxu0 0.0
        %926 = vmatpush1.xpose.msra.mxu0 0.0
        %927 = vmatprep.subr.mxu0 0.0
        %928 = vmatpush1.xpose.msra.mxu0 0.0
        %929 = vmatprep.subr.mxu0 0.0
        %930 = vmatpush1.xpose.msra.mxu0 0.0
        %931 = vmatprep.subr.mxu0 0.0
        %932 = vmatpush1.xpose.msra.mxu0 0.0
        %933 = vmatprep.subr.mxu0 0.0
        %934 = vmatpush1.xpose.msra.mxu0 0.0
        %935 = vmatprep.subr.mxu0 0.0
        %936 = vmatpush1.xpose.msra.mxu0 0.0
        %937 = vmatprep.subr.mxu0 0.0
        %938 = vmatpush1.xpose.msra.mxu0 0.0
        %939 = vmatprep.subr.mxu0 0.0
        %940 = vmatpush1.xpose.msra.mxu0 0.0
        %941 = vmatprep.subr.mxu0 0.0
        %942 = vmatpush1.xpose.msra.mxu0 0.0
        %943 = vmatprep.subr.mxu0 0.0
        %944 = vmatpush1.xpose.msra.mxu0 0.0
        %945 = vmatprep.subr.mxu0 0.0
        %946 = vmatpush1.xpose.msra.mxu0 0.0
        %947 = vmatprep.subr.mxu0 0.0
        %948 = vmatpush1.xpose.msra.mxu0 0.0
        %949 = vmatprep.subr.mxu0 0.0
        %950 = vmatpush1.xpose.msra.mxu0 0.0
        %951 = vmatprep.subr.mxu0 0.0
        %952 = vmatpush1.xpose.msra.mxu0 0.0
        %953 = vmatprep.subr.mxu0 0.0
        %954 = vmatpush1.xpose.msra.mxu0 0.0
        %955 = vmatprep.subr.mxu0 0.0
        %956 = vmatpush1.xpose.msra.mxu0 0.0
        %957 = vmatprep.subr.mxu0 0.0
        %958 = vmatpush1.xpose.msra.mxu0 0.0
        %959 = vmatprep.subr.mxu0 0.0
        %960 = vmatpush1.xpose.msra.mxu0 0.0
        %961 = vmatprep.subr.mxu0 0.0
        %962 = vmatpush1.xpose.msra.mxu0 0.0
        %963 = vmatprep.subr.mxu0 0.0
        %964 = vmatpush1.xpose.msra.mxu0 0.0
        %965 = vmatprep.subr.mxu0 0.0
        %966 = vmatpush1.xpose.msra.mxu0 0.0
        %967 = vmatprep.subr.mxu0 0.0
        %968 = vmatpush1.xpose.msra.mxu0 0.0
        %969 = vmatprep.subr.mxu0 0.0
        %970 = vmatpush1.xpose.msra.mxu0 0.0
        %971 = vmatprep.subr.mxu0 0.0
        %972 = vmatpush1.xpose.msra.mxu0 0.0
        %973 = vmatprep.subr.mxu0 0.0
        %974 = vmatpush1.xpose.msra.mxu0 0.0
        %975 = vmatprep.subr.mxu0 0.0
        %976 = vmatpush1.xpose.msra.mxu0 0.0
        %977 = vmatprep.mubr.f32.mxu0 0.0
        %978 = vmatmul.mubr.f32.gmra.mrb[0].mxu0 %v909
        %v979 = vpop.f32.mrb[0].mxu0
        %v980 = vadd.f32 0.0, %v979
        %v981 = vpop.f32.mrb[0].mxu0
        %982 = vdwg.mxu0
        %v983 = vsel %vm742, %v980, -inf
        %984 = vmax.xlane.f32.xlu0 %v983
        %v985 = vpop.xlane.xlu0 %984
        %v986 = vsub.f32 %v980, %v985
        %v987 = vmul.f32 %v986, 1.442695
        %v988 = vpow.pop %v987
        %v989 = vsel %vm742, %v988, 0.0
        %990 = vadd.xlane.f32.xlu0 %v989
        %v991 = vpop.xlane.xlu0 %990
        %v992 = vrcp.pop %v991
        %v993 = vmul.f32 %v988, %v992
        %994 = vrot.lane.b32.xlu0 %v735, 56
        %v995 = vpop.permute.xlu0 %994
        %v998 = vsel %vm742, %v993, 0
        %1000 = vmatprep.subr.mxu0 0.0
        %1001 = vmatpush1.msra.mxu0 %v995
        %1002 = vmatprep.subr.mxu0 0.0
        %1003 = vmatpush1.msra.mxu0 0.0
        %1004 = vmatprep.subr.mxu0 0.0
        %1005 = vmatpush1.msra.mxu0 0.0
        %1006 = vmatprep.subr.mxu0 0.0
        %1007 = vmatpush1.msra.mxu0 0.0
        %1008 = vmatprep.subr.mxu0 0.0
        %1009 = vmatpush1.msra.mxu0 0.0
        %1010 = vmatprep.subr.mxu0 0.0
        %1011 = vmatpush1.msra.mxu0 0.0
        %1012 = vmatprep.subr.mxu0 0.0
        %1013 = vmatpush1.msra.mxu0 0.0
        %1014 = vmatprep.subr.mxu0 0.0
        %1015 = vmatpush1.msra.mxu0 0.0
        %1016 = vmatprep.subr.mxu0 0.0
        %1017 = vmatpush1.msra.mxu0 0.0
        %1018 = vmatprep.subr.mxu0 0.0
        %1019 = vmatpush1.msra.mxu0 0.0
        %1020 = vmatprep.subr.mxu0 0.0
        %1021 = vmatpush1.msra.mxu0 0.0
        %1022 = vmatprep.subr.mxu0 0.0
        %1023 = vmatpush1.msra.mxu0 0.0
        %1024 = vmatprep.subr.mxu0 0.0
        %1025 = vmatpush1.msra.mxu0 0.0
        %1026 = vmatprep.subr.mxu0 0.0
        %1027 = vmatpush1.msra.mxu0 0.0
        %1028 = vmatprep.subr.mxu0 0.0
        %1029 = vmatpush1.msra.mxu0 0.0
        %1030 = vmatprep.subr.mxu0 0.0
        %1031 = vmatpush1.msra.mxu0 0.0
        %1032 = vmatprep.subr.mxu0 0.0
        %1033 = vmatpush1.msra.mxu0 0.0
        %1034 = vmatprep.subr.mxu0 0.0
        %1035 = vmatpush1.msra.mxu0 0.0
        %1036 = vmatprep.subr.mxu0 0.0
        %1037 = vmatpush1.msra.mxu0 0.0
        %1038 = vmatprep.subr.mxu0 0.0
        %1039 = vmatpush1.msra.mxu0 0.0
        %1040 = vmatprep.subr.mxu0 0.0
        %1041 = vmatpush1.msra.mxu0 0.0
        %1042 = vmatprep.subr.mxu0 0.0
        %1043 = vmatpush1.msra.mxu0 0.0
        %1044 = vmatprep.subr.mxu0 0.0
        %1045 = vmatpush1.msra.mxu0 0.0
        %1046 = vmatprep.subr.mxu0 0.0
        %1047 = vmatpush1.msra.mxu0 0.0
        %1048 = vmatprep.subr.mxu0 0.0
        %1049 = vmatpush1.msra.mxu0 0.0
        %1050 = vmatprep.subr.mxu0 0.0
        %1051 = vmatpush1.msra.mxu0 0.0
        %1052 = vmatprep.subr.mxu0 0.0
        %1053 = vmatpush1.msra.mxu0 0.0
        %1054 = vmatprep.subr.mxu0 0.0
        %1055 = vmatpush1.msra.mxu0 0.0
        %1056 = vmatprep.subr.mxu0 0.0
        %1057 = vmatpush1.msra.mxu0 0.0
        %1058 = vmatprep.subr.mxu0 0.0
        %1059 = vmatpush1.msra.mxu0 0.0
        %1060 = vmatprep.subr.mxu0 0.0
        %1061 = vmatpush1.msra.mxu0 0.0
        %1062 = vmatprep.subr.mxu0 0.0
        %1063 = vmatpush1.msra.mxu0 0.0
        %1064 = vmatprep.mubr.f32.mxu0 0.0
        %1065 = vmatmul.mubr.f32.gmra.mrb[0].mxu0 %v998
        %v1066 = vpop.f32.mrb[0].mxu0
        %v1067 = vadd.f32 0.0, %v1066
        %v1068 = vpop.f32.mrb[0].mxu0
        %1069 = vdwg.mxu0
        %1070 = vrot.lane.b32.xlu0 %v738, 112
        %v1071 = vpop.permute.xlu0 %1070
        %1072 = vrot.lane.b32.xlu0 %v735, 80
        %v1073 = vpop.permute.xlu0 %1072
        %v1074 = vsel %vm742, %v1071, 0
        %v1076 = vsel %vm742, %v1073, 0
        %1078 = vmatprep.subr.mxu0 0.0
        %1079 = vmatpush1.xpose.msra.mxu0 %v1076
        %1080 = vmatprep.subr.mxu0 0.0
        %1081 = vmatpush1.xpose.msra.mxu0 0.0
        %1082 = vmatprep.subr.mxu0 0.0
        %1083 = vmatpush1.xpose.msra.mxu0 0.0
        %1084 = vmatprep.subr.mxu0 0.0
        %1085 = vmatpush1.xpose.msra.mxu0 0.0
        %1086 = vmatprep.subr.mxu0 0.0
        %1087 = vmatpush1.xpose.msra.mxu0 0.0
        %1088 = vmatprep.subr.mxu0 0.0
        %1089 = vmatpush1.xpose.msra.mxu0 0.0
        %1090 = vmatprep.subr.mxu0 0.0
        %1091 = vmatpush1.xpose.msra.mxu0 0.0
        %1092 = vmatprep.subr.mxu0 0.0
        %1093 = vmatpush1.xpose.msra.mxu0 0.0
        %1094 = vmatprep.subr.mxu0 0.0
        %1095 = vmatpush1.xpose.msra.mxu0 0.0
        %1096 = vmatprep.subr.mxu0 0.0
        %1097 = vmatpush1.xpose.msra.mxu0 0.0
        %1098 = vmatprep.subr.mxu0 0.0
        %1099 = vmatpush1.xpose.msra.mxu0 0.0
        %1100 = vmatprep.subr.mxu0 0.0
        %1101 = vmatpush1.xpose.msra.mxu0 0.0
        %1102 = vmatprep.subr.mxu0 0.0
        %1103 = vmatpush1.xpose.msra.mxu0 0.0
        %1104 = vmatprep.subr.mxu0 0.0
        %1105 = vmatpush1.xpose.msra.mxu0 0.0
        %1106 = vmatprep.subr.mxu0 0.0
        %1107 = vmatpush1.xpose.msra.mxu0 0.0
        %1108 = vmatprep.subr.mxu0 0.0
        %1109 = vmatpush1.xpose.msra.mxu0 0.0
        %1110 = vmatprep.subr.mxu0 0.0
        %1111 = vmatpush1.xpose.msra.mxu0 0.0
        %1112 = vmatprep.subr.mxu0 0.0
        %1113 = vmatpush1.xpose.msra.mxu0 0.0
        %1114 = vmatprep.subr.mxu0 0.0
        %1115 = vmatpush1.xpose.msra.mxu0 0.0
        %1116 = vmatprep.subr.mxu0 0.0
        %1117 = vmatpush1.xpose.msra.mxu0 0.0
        %1118 = vmatprep.subr.mxu0 0.0
        %1119 = vmatpush1.xpose.msra.mxu0 0.0
        %1120 = vmatprep.subr.mxu0 0.0
        %1121 = vmatpush1.xpose.msra.mxu0 0.0
        %1122 = vmatprep.subr.mxu0 0.0
        %1123 = vmatpush1.xpose.msra.mxu0 0.0
        %1124 = vmatprep.subr.mxu0 0.0
        %1125 = vmatpush1.xpose.msra.mxu0 0.0
        %1126 = vmatprep.subr.mxu0 0.0
        %1127 = vmatpush1.xpose.msra.mxu0 0.0
        %1128 = vmatprep.subr.mxu0 0.0
        %1129 = vmatpush1.xpose.msra.mxu0 0.0
        %1130 = vmatprep.subr.mxu0 0.0
        %1131 = vmatpush1.xpose.msra.mxu0 0.0
        %1132 = vmatprep.subr.mxu0 0.0
        %1133 = vmatpush1.xpose.msra.mxu0 0.0
        %1134 = vmatprep.subr.mxu0 0.0
        %1135 = vmatpush1.xpose.msra.mxu0 0.0
        %1136 = vmatprep.subr.mxu0 0.0
        %1137 = vmatpush1.xpose.msra.mxu0 0.0
        %1138 = vmatprep.subr.mxu0 0.0
        %1139 = vmatpush1.xpose.msra.mxu0 0.0
        %1140 = vmatprep.subr.mxu0 0.0
        %1141 = vmatpush1.xpose.msra.mxu0 0.0
        %1142 = vmatprep.mubr.f32.mxu0 0.0
        %1143 = vmatmul.mubr.f32.gmra.mrb[0].mxu0 %v1074
        %v1144 = vpop.f32.mrb[0].mxu0
        %v1145 = vadd.f32 0.0, %v1144
        %v1146 = vpop.f32.mrb[0].mxu0
        %1147 = vdwg.mxu0
        %v1148 = vsel %vm742, %v1145, -inf
        %1149 = vmax.xlane.f32.xlu0 %v1148
        %v1150 = vpop.xlane.xlu0 %1149
        %v1151 = vsub.f32 %v1145, %v1150
        %v1152 = vmul.f32 %v1151, 1.442695
        %v1153 = vpow.pop %v1152
        %v1154 = vsel %vm742, %v1153, 0.0
        %1155 = vadd.xlane.f32.xlu0 %v1154
        %v1156 = vpop.xlane.xlu0 %1155
        %v1157 = vrcp.pop %v1156
        %v1158 = vmul.f32 %v1153, %v1157
        %1159 = vrot.lane.b32.xlu0 %v735, 48
        %v1160 = vpop.permute.xlu0 %1159
        %v1163 = vsel %vm742, %v1158, 0
        %1165 = vmatprep.subr.mxu0 0.0
        %1166 = vmatpush1.msra.mxu0 %v1160
        %1167 = vmatprep.subr.mxu0 0.0
        %1168 = vmatpush1.msra.mxu0 0.0
        %1169 = vmatprep.subr.mxu0 0.0
        %1170 = vmatpush1.msra.mxu0 0.0
        %1171 = vmatprep.subr.mxu0 0.0
        %1172 = vmatpush1.msra.mxu0 0.0
        %1173 = vmatprep.subr.mxu0 0.0
        %1174 = vmatpush1.msra.mxu0 0.0
        %1175 = vmatprep.subr.mxu0 0.0
        %1176 = vmatpush1.msra.mxu0 0.0
        %1177 = vmatprep.subr.mxu0 0.0
        %1178 = vmatpush1.msra.mxu0 0.0
        %1179 = vmatprep.subr.mxu0 0.0
        %1180 = vmatpush1.msra.mxu0 0.0
        %1181 = vmatprep.subr.mxu0 0.0
        %1182 = vmatpush1.msra.mxu0 0.0
        %1183 = vmatprep.subr.mxu0 0.0
        %1184 = vmatpush1.msra.mxu0 0.0
        %1185 = vmatprep.subr.mxu0 0.0
        %1186 = vmatpush1.msra.mxu0 0.0
        %1187 = vmatprep.subr.mxu0 0.0
        %1188 = vmatpush1.msra.mxu0 0.0
        %1189 = vmatprep.subr.mxu0 0.0
        %1190 = vmatpush1.msra.mxu0 0.0
        %1191 = vmatprep.subr.mxu0 0.0
        %1192 = vmatpush1.msra.mxu0 0.0
        %1193 = vmatprep.subr.mxu0 0.0
        %1194 = vmatpush1.msra.mxu0 0.0
        %1195 = vmatprep.subr.mxu0 0.0
        %1196 = vmatpush1.msra.mxu0 0.0
        %1197 = vmatprep.subr.mxu0 0.0
        %1198 = vmatpush1.msra.mxu0 0.0
        %1199 = vmatprep.subr.mxu0 0.0
        %1200 = vmatpush1.msra.mxu0 0.0
        %1201 = vmatprep.subr.mxu0 0.0
        %1202 = vmatpush1.msra.mxu0 0.0
        %1203 = vmatprep.subr.mxu0 0.0
        %1204 = vmatpush1.msra.mxu0 0.0
        %1205 = vmatprep.subr.mxu0 0.0
        %1206 = vmatpush1.msra.mxu0 0.0
        %1207 = vmatprep.subr.mxu0 0.0
        %1208 = vmatpush1.msra.mxu0 0.0
        %1209 = vmatprep.subr.mxu0 0.0
        %1210 = vmatpush1.msra.mxu0 0.0
        %1211 = vmatprep.subr.mxu0 0.0
        %1212 = vmatpush1.msra.mxu0 0.0
        %1213 = vmatprep.subr.mxu0 0.0
        %1214 = vmatpush1.msra.mxu0 0.0
        %1215 = vmatprep.subr.mxu0 0.0
        %1216 = vmatpush1.msra.mxu0 0.0
        %1217 = vmatprep.subr.mxu0 0.0
        %1218 = vmatpush1.msra.mxu0 0.0
        %1219 = vmatprep.subr.mxu0 0.0
        %1220 = vmatpush1.msra.mxu0 0.0
        %1221 = vmatprep.subr.mxu0 0.0
        %1222 = vmatpush1.msra.mxu0 0.0
        %1223 = vmatprep.subr.mxu0 0.0
        %1224 = vmatpush1.msra.mxu0 0.0
        %1225 = vmatprep.subr.mxu0 0.0
        %1226 = vmatpush1.msra.mxu0 0.0
        %1227 = vmatprep.subr.mxu0 0.0
        %1228 = vmatpush1.msra.mxu0 0.0
        %1229 = vmatprep.mubr.f32.mxu0 0.0
        %1230 = vmatmul.mubr.f32.gmra.mrb[0].mxu0 %v1163
        %v1231 = vpop.f32.mrb[0].mxu0
        %v1232 = vadd.f32 0.0, %v1231
        %v1233 = vpop.f32.mrb[0].mxu0
        %1234 = vdwg.mxu0
        %1235 = vrot.lane.b32.xlu0 %v738, 104
        %v1236 = vpop.permute.xlu0 %1235
        %1237 = vrot.lane.b32.xlu0 %v735, 72
        %v1238 = vpop.permute.xlu0 %1237
        %v1239 = vsel %vm742, %v1236, 0
        %v1241 = vsel %vm742, %v1238, 0
        %1243 = vmatprep.subr.mxu0 0.0
        %1244 = vmatpush1.xpose.msra.mxu0 %v1241
        %1245 = vmatprep.subr.mxu0 0.0
        %1246 = vmatpush1.xpose.msra.mxu0 0.0
        %1247 = vmatprep.subr.mxu0 0.0
        %1248 = vmatpush1.xpose.msra.mxu0 0.0
        %1249 = vmatprep.subr.mxu0 0.0
        %1250 = vmatpush1.xpose.msra.mxu0 0.0
        %1251 = vmatprep.subr.mxu0 0.0
        %1252 = vmatpush1.xpose.msra.mxu0 0.0
        %1253 = vmatprep.subr.mxu0 0.0
        %1254 = vmatpush1.xpose.msra.mxu0 0.0
        %1255 = vmatprep.subr.mxu0 0.0
        %1256 = vmatpush1.xpose.msra.mxu0 0.0
        %1257 = vmatprep.subr.mxu0 0.0
        %1258 = vmatpush1.xpose.msra.mxu0 0.0
        %1259 = vmatprep.subr.mxu0 0.0
        %1260 = vmatpush1.xpose.msra.mxu0 0.0
        %1261 = vmatprep.subr.mxu0 0.0
        %1262 = vmatpush1.xpose.msra.mxu0 0.0
        %1263 = vmatprep.subr.mxu0 0.0
        %1264 = vmatpush1.xpose.msra.mxu0 0.0
        %1265 = vmatprep.subr.mxu0 0.0
        %1266 = vmatpush1.xpose.msra.mxu0 0.0
        %1267 = vmatprep.subr.mxu0 0.0
        %1268 = vmatpush1.xpose.msra.mxu0 0.0
        %1269 = vmatprep.subr.mxu0 0.0
        %1270 = vmatpush1.xpose.msra.mxu0 0.0
        %1271 = vmatprep.subr.mxu0 0.0
        %1272 = vmatpush1.xpose.msra.mxu0 0.0
        %1273 = vmatprep.subr.mxu0 0.0
        %1274 = vmatpush1.xpose.msra.mxu0 0.0
        %1275 = vmatprep.subr.mxu0 0.0
        %1276 = vmatpush1.xpose.msra.mxu0 0.0
        %1277 = vmatprep.subr.mxu0 0.0
        %1278 = vmatpush1.xpose.msra.mxu0 0.0
        %1279 = vmatprep.subr.mxu0 0.0
        %1280 = vmatpush1.xpose.msra.mxu0 0.0
        %1281 = vmatprep.subr.mxu0 0.0
        %1282 = vmatpush1.xpose.msra.mxu0 0.0
        %1283 = vmatprep.subr.mxu0 0.0
        %1284 = vmatpush1.xpose.msra.mxu0 0.0
        %1285 = vmatprep.subr.mxu0 0.0
        %1286 = vmatpush1.xpose.msra.mxu0 0.0
        %1287 = vmatprep.subr.mxu0 0.0
        %1288 = vmatpush1.xpose.msra.mxu0 0.0
        %1289 = vmatprep.subr.mxu0 0.0
        %1290 = vmatpush1.xpose.msra.mxu0 0.0
        %1291 = vmatprep.subr.mxu0 0.0
        %1292 = vmatpush1.xpose.msra.mxu0 0.0
        %1293 = vmatprep.subr.mxu0 0.0
        %1294 = vmatpush1.xpose.msra.mxu0 0.0
        %1295 = vmatprep.subr.mxu0 0.0
        %1296 = vmatpush1.xpose.msra.mxu0 0.0
        %1297 = vmatprep.subr.mxu0 0.0
        %1298 = vmatpush1.xpose.msra.mxu0 0.0
        %1299 = vmatprep.subr.mxu0 0.0
        %1300 = vmatpush1.xpose.msra.mxu0 0.0
        %1301 = vmatprep.subr.mxu0 0.0
        %1302 = vmatpush1.xpose.msra.mxu0 0.0
        %1303 = vmatprep.subr.mxu0 0.0
        %1304 = vmatpush1.xpose.msra.mxu0 0.0
        %1305 = vmatprep.subr.mxu0 0.0
        %1306 = vmatpush1.xpose.msra.mxu0 0.0
        %1307 = vmatprep.mubr.f32.mxu0 0.0
        %1308 = vmatmul.mubr.f32.gmra.mrb[0].mxu0 %v1239
        %v1309 = vpop.f32.mrb[0].mxu0
        %v1310 = vadd.f32 0.0, %v1309
        %v1311 = vpop.f32.mrb[0].mxu0
        %1312 = vdwg.mxu0
        %v1313 = vsel %vm742, %v1310, -inf
        %1314 = vmax.xlane.f32.xlu0 %v1313
        %v1315 = vpop.xlane.xlu0 %1314
        %v1316 = vsub.f32 %v1310, %v1315
        %v1317 = vmul.f32 %v1316, 1.442695
        %v1318 = vpow.pop %v1317
        %v1319 = vsel %vm742, %v1318, 0.0
        %1320 = vadd.xlane.f32.xlu0 %v1319
        %v1321 = vpop.xlane.xlu0 %1320
        %v1322 = vrcp.pop %v1321
        %v1323 = vmul.f32 %v1318, %v1322
        %1324 = vrot.lane.b32.xlu0 %v735, 40
        %v1325 = vpop.permute.xlu0 %1324
        %v1328 = vsel %vm742, %v1323, 0
        %1330 = vmatprep.subr.mxu0 0.0
        %1331 = vmatpush1.msra.mxu0 %v1325
        %1332 = vmatprep.subr.mxu0 0.0
        %1333 = vmatpush1.msra.mxu0 0.0
        %1334 = vmatprep.subr.mxu0 0.0
        %1335 = vmatpush1.msra.mxu0 0.0
        %1336 = vmatprep.subr.mxu0 0.0
        %1337 = vmatpush1.msra.mxu0 0.0
        %1338 = vmatprep.subr.mxu0 0.0
        %1339 = vmatpush1.msra.mxu0 0.0
        %1340 = vmatprep.subr.mxu0 0.0
        %1341 = vmatpush1.msra.mxu0 0.0
        %1342 = vmatprep.subr.mxu0 0.0
        %1343 = vmatpush1.msra.mxu0 0.0
        %1344 = vmatprep.subr.mxu0 0.0
        %1345 = vmatpush1.msra.mxu0 0.0
        %1346 = vmatprep.subr.mxu0 0.0
        %1347 = vmatpush1.msra.mxu0 0.0
        %1348 = vmatprep.subr.mxu0 0.0
        %1349 = vmatpush1.msra.mxu0 0.0
        %1350 = vmatprep.subr.mxu0 0.0
        %1351 = vmatpush1.msra.mxu0 0.0
        %1352 = vmatprep.subr.mxu0 0.0
        %1353 = vmatpush1.msra.mxu0 0.0
        %1354 = vmatprep.subr.mxu0 0.0
        %1355 = vmatpush1.msra.mxu0 0.0
        %1356 = vmatprep.subr.mxu0 0.0
        %1357 = vmatpush1.msra.mxu0 0.0
        %1358 = vmatprep.subr.mxu0 0.0
        %1359 = vmatpush1.msra.mxu0 0.0
        %1360 = vmatprep.subr.mxu0 0.0
        %1361 = vmatpush1.msra.mxu0 0.0
        %1362 = vmatprep.subr.mxu0 0.0
        %1363 = vmatpush1.msra.mxu0 0.0
        %1364 = vmatprep.subr.mxu0 0.0
        %1365 = vmatpush1.msra.mxu0 0.0
        %1366 = vmatprep.subr.mxu0 0.0
        %1367 = vmatpush1.msra.mxu0 0.0
        %1368 = vmatprep.subr.mxu0 0.0
        %1369 = vmatpush1.msra.mxu0 0.0
        %1370 = vmatprep.subr.mxu0 0.0
        %1371 = vmatpush1.msra.mxu0 0.0
        %1372 = vmatprep.subr.mxu0 0.0
        %1373 = vmatpush1.msra.mxu0 0.0
        %1374 = vmatprep.subr.mxu0 0.0
        %1375 = vmatpush1.msra.mxu0 0.0
        %1376 = vmatprep.subr.mxu0 0.0
        %1377 = vmatpush1.msra.mxu0 0.0
        %1378 = vmatprep.subr.mxu0 0.0
        %1379 = vmatpush1.msra.mxu0 0.0
        %1380 = vmatprep.subr.mxu0 0.0
        %1381 = vmatpush1.msra.mxu0 0.0
        %1382 = vmatprep.subr.mxu0 0.0
        %1383 = vmatpush1.msra.mxu0 0.0
        %1384 = vmatprep.subr.mxu0 0.0
        %1385 = vmatpush1.msra.mxu0 0.0
        %1386 = vmatprep.subr.mxu0 0.0
        %1387 = vmatpush1.msra.mxu0 0.0
        %1388 = vmatprep.subr.mxu0 0.0
        %1389 = vmatpush1.msra.mxu0 0.0
        %1390 = vmatprep.subr.mxu0 0.0
        %1391 = vmatpush1.msra.mxu0 0.0
        %1392 = vmatprep.subr.mxu0 0.0
        %1393 = vmatpush1.msra.mxu0 0.0
        %1394 = vmatprep.mubr.f32.mxu0 0.0
        %1395 = vmatmul.mubr.f32.gmra.mrb[0].mxu0 %v1328
        %v1396 = vpop.f32.mrb[0].mxu0
        %v1397 = vadd.f32 0.0, %v1396
        %v1398 = vpop.f32.mrb[0].mxu0
        %1399 = vdwg.mxu0
        %1401 = vrot.lane.b32.xlu0 %v1067, 8
        %v1402 = vpop.permute.xlu0 %1401
        %1405 = vrot.lane.b32.xlu0 %v1232, 16
        %v1406 = vpop.permute.xlu0 %1405
        %1409 = vrot.lane.b32.xlu0 %v1397, 24
        %v1410 = vpop.permute.xlu0 %1409
        %v1412 = vsel %vm742, %v902, %v1402
        %v1413 = vsel %vm576, %v1412, %v1406
        %vm1414 = vcmask 195584
        %v1415 = vsel %vm1414, %v1413, %v1410
        %v1416 = vld [vmem:[#allocation5] sm:$0xff]
        %v1417 = vld [vmem:[#allocation5 + $0x8] sm:$0xff]
        %v1418 = vld [vmem:[#allocation5 + $0x10] sm:$0xff]
        %v1419 = vld [vmem:[#allocation5 + $0x18] sm:$0xff]
        %v1420 = vld [vmem:[#allocation7] sm:$0x1]
        %v1422 = vlaneseq
        %v1423 = vshrl.u32 %v1422, 7
        %v1424 = vsub.s32 0, %v1423
        %v1425 = vrot.slane %v1420, %v1424
        %v1428 = vsel %vm484, %v1415, 0
        %1430 = vmatprep.subr.mxu0 0.0
        %1431 = vmatpush1.msra.mxu0 %v1416
        %1432 = vmatprep.subr.mxu0 0.0
        %1433 = vmatpush1.msra.mxu0 %v1417
        %1434 = vmatprep.subr.mxu0 0.0
        %1435 = vmatpush1.msra.mxu0 %v1418
        %1436 = vmatprep.subr.mxu0 0.0
        %1437 = vmatpush1.msra.mxu0 %v1419
        %1438 = vmatprep.subr.mxu0 0.0
        %1439 = vmatpush1.msra.mxu0 0.0
        %1440 = vmatprep.subr.mxu0 0.0
        %1441 = vmatpush1.msra.mxu0 0.0
        %1442 = vmatprep.subr.mxu0 0.0
        %1443 = vmatpush1.msra.mxu0 0.0
        %1444 = vmatprep.subr.mxu0 0.0
        %1445 = vmatpush1.msra.mxu0 0.0
        %1446 = vmatprep.subr.mxu0 0.0
        %1447 = vmatpush1.msra.mxu0 0.0
        %1448 = vmatprep.subr.mxu0 0.0
        %1449 = vmatpush1.msra.mxu0 0.0
        %1450 = vmatprep.subr.mxu0 0.0
        %1451 = vmatpush1.msra.mxu0 0.0
        %1452 = vmatprep.subr.mxu0 0.0
        %1453 = vmatpush1.msra.mxu0 0.0
        %1454 = vmatprep.subr.mxu0 0.0
        %1455 = vmatpush1.msra.mxu0 0.0
        %1456 = vmatprep.subr.mxu0 0.0
        %1457 = vmatpush1.msra.mxu0 0.0
        %1458 = vmatprep.subr.mxu0 0.0
        %1459 = vmatpush1.msra.mxu0 0.0
        %1460 = vmatprep.subr.mxu0 0.0
        %1461 = vmatpush1.msra.mxu0 0.0
        %1462 = vmatprep.subr.mxu0 0.0
        %1463 = vmatpush1.msra.mxu0 0.0
        %1464 = vmatprep.subr.mxu0 0.0
        %1465 = vmatpush1.msra.mxu0 0.0
        %1466 = vmatprep.subr.mxu0 0.0
        %1467 = vmatpush1.msra.mxu0 0.0
        %1468 = vmatprep.subr.mxu0 0.0
        %1469 = vmatpush1.msra.mxu0 0.0
        %1470 = vmatprep.subr.mxu0 0.0
        %1471 = vmatpush1.msra.mxu0 0.0
        %1472 = vmatprep.subr.mxu0 0.0
        %1473 = vmatpush1.msra.mxu0 0.0
        %1474 = vmatprep.subr.mxu0 0.0
        %1475 = vmatpush1.msra.mxu0 0.0
        %1476 = vmatprep.subr.mxu0 0.0
        %1477 = vmatpush1.msra.mxu0 0.0
        %1478 = vmatprep.subr.mxu0 0.0
        %1479 = vmatpush1.msra.mxu0 0.0
        %1480 = vmatprep.subr.mxu0 0.0
        %1481 = vmatpush1.msra.mxu0 0.0
        %1482 = vmatprep.subr.mxu0 0.0
        %1483 = vmatpush1.msra.mxu0 0.0
        %1484 = vmatprep.subr.mxu0 0.0
        %1485 = vmatpush1.msra.mxu0 0.0
        %1486 = vmatprep.subr.mxu0 0.0
        %1487 = vmatpush1.msra.mxu0 0.0
        %1488 = vmatprep.subr.mxu0 0.0
        %1489 = vmatpush1.msra.mxu0 0.0
        %1490 = vmatprep.subr.mxu0 0.0
        %1491 = vmatpush1.msra.mxu0 0.0
        %1492 = vmatprep.subr.mxu0 0.0
        %1493 = vmatpush1.msra.mxu0 0.0
        %1494 = vmatprep.mubr.f32.mxu0 0.0
        %1495 = vmatmul.mubr.f32.gmra.mrb[0].mxu0 %v1428
        %v1496 = vpop.f32.mrb[0].mxu0
        %v1497 = vadd.f32 %v1425, %v1496
        %v1498 = vpop.f32.mrb[0].mxu0
        %1499 = vdwg.mxu0
        %v1500 = vadd.f32 %v1497, %v483
        %v1501 = vsel %vm484, %v1500, 0.0
        %1502 = vadd.xlane.f32.xlu0 %v1501
        %v1503 = vpop.xlane.xlu0 %1502
        %v1504 = vrcp.pop 32.0
        %v1505 = vmul.f32 %v1503, %v1504
        %v1506 = vsub.f32 %v1500, %v1505
        %v1507 = vmul.f32 %v1506, %v1506
        %v1508 = vsel %vm484, %v1507, 0.0
        %1509 = vadd.xlane.f32.xlu0 %v1508
        %v1510 = vpop.xlane.xlu0 %1509
        %v1511 = vmul.f32 %v1510, %v1504
        %v1512 = vadd.f32 %v1511, 1e-05
        %v1513 = vrsqrt.pop %v1512
        %v1514 = vmul.f32 %v1506, %v1513
        %v1515 = vld [vmem:[#allocation8] sm:$0x1]
        %v1517 = vlaneseq
        %v1518 = vshrl.u32 %v1517, 7
        %v1519 = vsub.s32 0, %v1518
        %v1520 = vrot.slane %v1515, %v1519
        %v1522 = vmul.f32 %v1514, %v1520
        %v1523 = vld [vmem:[#allocation10] sm:$0x1]
        %v1525 = vlaneseq
        %v1526 = vshrl.u32 %v1525, 7
        %v1527 = vsub.s32 0, %v1526
        %v1528 = vrot.slane %v1523, %v1527
        %v1530 = vadd.f32 %v1522, %v1528
        %1531 = vst.msk [vmem:[%s470] sm:$0xff] %vm484, %v1530
        %s1532 = sand.u32 %s274, 1
        %s1533 = scalar_lea.sflag [#allocation4], %s1532
        %s1534 = sand.u32 %s274, 1
        %s1535 = smul.addr %s1534, 8
        %s1536 = scalar_lea.vmem [#allocation11], %s1535
        %p1537 = scmp.lt.s32.totalorder %s30, 5
        %s1538 = scalar_select %p1537, %s30, 5
        %s1539 = scalar_lea.vmem %s12, %s1538
        // Predicated region
        $region85: #{intra_model_reasoning_cell.1} parent=63 // pred_check
          %p1540 = pneg %p284
        $region86: #{intra_model_reasoning_cell.1} parent=63 // pred_check_branch
          %1542 = sbr.rel (%p1540) target = $region88
        $region87: #{intra_model_reasoning_cell.1} parent=63 // pred_region
          %s1544 = ssub.s32 128, 128
          %1545 = vsyncadd %s1533, %s1544
          %s1546 = smul.addr %s30, 128
          %s1547 = scalar_lea.hbm %s11, %s1546
          %s1549 = sshll.u32 %s1536, 4
          %s1550 = int_to_ptr.vmem [resolvable:$true] %s1549
          %1552 = dma.vmem_to_hbm [thread:$0]  %s1550, 128, %s1547, %s1533
        $region88: #{intra_model_reasoning_cell.1} parent=63 // pred_fallthru
          _
        // Predicated region
        $region89: #{intra_model_reasoning_cell.1} parent=63 // pred_check
          %p1553 = pneg %p310
        $region90: #{intra_model_reasoning_cell.1} parent=63 // pred_check_branch
          %1555 = sbr.rel (%p1553) target = $region92
        $region91: #{intra_model_reasoning_cell.1} parent=63 // pred_region
          _
        $region92: #{intra_model_reasoning_cell.1} parent=63 // pred_fallthru
          _
      $region64: #{intra_model_reasoning_cell.1} parent=5 // pred_fallthru
        _
      %p1556 = scmp.le.s32.totalorder 2, %s25
      // Predicated region
      $region93: #{intra_model_reasoning_cell.1} parent=5 // pred_check
        %p1557 = pneg %p1556
      $region94: #{intra_model_reasoning_cell.1} parent=5 // pred_check_branch
        %1559 = sbr.rel (%p1557) target = $region96
      $region95: #{intra_model_reasoning_cell.1} parent=5 // pred_region
        %s1560 = ssub.s32 %s25, 2
        // Predicated region
        $region97: #{intra_model_reasoning_cell.1} parent=95 // pred_check
          %p1561 = pneg %p290
        $region98: #{intra_model_reasoning_cell.1} parent=95 // pred_check_branch
          %1563 = sbr.rel (%p1561) target = $region100
        $region99: #{intra_model_reasoning_cell.1} parent=95 // pred_region
          %s1564 = sand.u32 %s275, 1
          %s1565 = scalar_lea.sflag [#allocation4], %s1564
          %s1566 = sand.u32 %s275, 1
          %s1567 = smul.addr %s1566, 8
          %s1568 = scalar_lea.vmem [#allocation11], %s1567
          %1569 = dma.done %s1565, 128
        $region100: #{intra_model_reasoning_cell.1} parent=95 // pred_fallthru
          _
        // Predicated region
        $region101: #{intra_model_reasoning_cell.1} parent=95 // pred_check
          %p1570 = pneg %p316
        $region102: #{intra_model_reasoning_cell.1} parent=95 // pred_check_branch
          %1572 = sbr.rel (%p1570) target = $region104
        $region103: #{intra_model_reasoning_cell.1} parent=95 // pred_region
          %p1573 = scmp.lt.s32.totalorder %s31, 5
          %s1574 = scalar_select %p1573, %s31, 5
          %s1575 = scalar_lea.vmem %s12, %s1574
        $region104: #{intra_model_reasoning_cell.1} parent=95 // pred_fallthru
          _
      $region96: #{intra_model_reasoning_cell.1} parent=5 // pred_fallthru
        _
    $region6: #{intra_model_reasoning_cell.1} parent=1 // loop_footer
      %s29 = sadd.s32 1, %s25
    $region7: #{intra_model_reasoning_cell.1} parent=1 // loop_footer_branch
      %24 = sbr.rel target = $region3
    $region8: #{intra_model_reasoning_cell.1} parent=1 // loop_exit
      _
    %1576 = vsyncpa [#allocation3], 1
    %s1577 = scalar_lea.sflag [#allocation3], 1
    %1578 = vsyncpa %s1577, 1
    %1579 = vsyncpa [#allocation6], 1
    %1580 = vsyncpa [#allocation9], 1
    %1581 = vsyncpa [#allocation4], 1
    %s1582 = scalar_lea.sflag [#allocation4], 1
    %1583 = vsyncpa %s1582, 1

</llo_original>
